<compile_context>
chip_gen: v5e
topology: v5e:2x2
jax: 0.10.0
libtpu: 0.0.40
codegen_flags: <defaults>
</compile_context>

<pallas_src>
import functools
import math

import numpy as np
import jax
import jax.numpy as jnp
from jax.experimental import pallas as pl
from jax.experimental.pallas import tpu as pltpu


def _upsample4x_kernel(x_ref, w0_ref, wm_ref, wp_ref, b_ref, o_ref, *, th, w, c):
    # x_ref : (1, 1, th+2, w, 3c) bf16  column-im2col'd rows (+1 halo row each side)
    # w0_ref: (3c, 16c)           bf16  row-offset 0 taps, all 4 row phases (p,q,co)
    # wm_ref: (3c, 4c)            bf16  row-offset -1 taps (row phase 0 only)
    # wp_ref: (3c, 4c)            bf16  row-offset +1 taps (row phase 3 only)
    # b_ref : (1, 16c)            f32   bias tiled over the 16 output phases
    # o_ref : (1, th, 4, w, 4c)         output tile, phases packed on minor dims
    n = th * w
    k = 3 * c
    c4 = 4 * c

    x3 = x_ref[0, 0]                                   # (th+2, w, 3c)
    lhs0 = x3[1:th + 1].reshape(n, k)                  # row offset  0
    lhsm = x3[0:th].reshape(n, k)                      # row offset -1
    lhsp = x3[2:th + 2].reshape(n, k)                  # row offset +1

    # 3 MXU matmuls (bf16 operands, f32 accumulation).
    r0 = jnp.dot(lhs0, w0_ref[...], preferred_element_type=jnp.float32)  # (n, 16c)
    rm = jnp.dot(lhsm, wm_ref[...], preferred_element_type=jnp.float32)  # (n, 4c)
    rp = jnp.dot(lhsp, wp_ref[...], preferred_element_type=jnp.float32)  # (n, 4c)

    acc = r0 + b_ref[...]                              # bias broadcast over n

    dt = o_ref.dtype
    o_ref[0, :, 0, :, :] = (acc[:, 0 * c4:1 * c4] + rm).reshape(th, w, c4).astype(dt)
    o_ref[0, :, 1, :, :] = acc[:, 1 * c4:2 * c4].reshape(th, w, c4).astype(dt)
    o_ref[0, :, 2, :, :] = acc[:, 2 * c4:3 * c4].reshape(th, w, c4).astype(dt)
    o_ref[0, :, 3, :, :] = (acc[:, 3 * c4:4 * c4] + rp).reshape(th, w, c4).astype(dt)


def _vmem_capacity_bytes():
    try:
        info = pltpu.get_tpu_info()
        cap = getattr(info, "vmem_capacity_bytes", None)
        if cap:
            return int(cap)
    except Exception:
        pass
    return 128 * 1024 * 1024  # v5e/v6e physical; v7x reports 64 MiB per core


def _pick_tile_rows(H, W, C, out_itemsize, budget_bytes, need_split):
    # Double-buffered input (bf16 im2col) + output blocks must fit the budget.
    best = 1
    for t in range(1, H + 1):
        if H % t != 0:
            continue
        if need_split and H >= 2 and (H // t) < 2:
            continue  # keep >=2 grid steps so both v7x TensorCores get work
        in_b = (t + 2) * W * 3 * C * 2
        out_b = t * 4 * W * 4 * C * out_itemsize
        if 2 * (in_b + out_b) <= budget_bytes:
            best = t
    return best


def upsample4x(x, weight, bias, *, tile_rows=None, channels_last=False):
    """x: (B, C, H, W), weight: (C, C, 3, 3) [OIHW], bias: (C,) -> (B, C, 4H, 4W)."""
    B, C, H, W = x.shape
    assert weight.shape == (C, C, 3, 3) and bias.shape == (C,)
    assert W % 8 == 0, "W must be a multiple of 8 (sublane tile) for this kernel"

    out_itemsize = jnp.dtype(x.dtype).itemsize
    weight_bytes = 2 * ((3 * C) * (16 * C) + 2 * (3 * C) * (4 * C)) * 2 + 16 * C * 4

    vmem_cap = _vmem_capacity_bytes()                       # 64 MiB (v7x) / 128 MiB
    vmem_limit = int(min(vmem_cap * 3 // 4, 100 << 20))     # raise scoped default
    block_budget = int(vmem_limit * 0.6) - weight_bytes

    if tile_rows is None:
        tile_rows = _pick_tile_rows(H, W, C, out_itemsize, block_budget,
                                    need_split=(B < 2))
    assert H % tile_rows == 0, "tile_rows must divide H"
    n_t = H // tile_rows

    # ---- weight folding: nearest-4x upsample + 3x3 conv -> per-phase taps ----
    # sel[p, r+1, dy+1] = 1 iff nearest-upsampled row 4i+p+dy comes from row i+r.
    sel_np = np.zeros((4, 3, 3), np.float32)
    for p in range(4):
        for d in (-1, 0, 1):
            sel_np[p, ((p + d) // 4) + 1, d + 1] = 1.0
    sel = jnp.asarray(sel_np, dtype=jnp.float32)
    w_f32 = weight.astype(jnp.float32)
    # weff[p, q, r, s, ci, co]: effective tap at source offset (r-1, s-1).
    weff = jnp.einsum('prk,qsl,oikl->pqrsio', sel, sel, w_f32)
    # Row offset 0 feeds every row phase -> one (3C, 16C) matrix, N = (p, q, co).
    w0 = jnp.transpose(weff[:, :, 1], (2, 3, 0, 1, 4)).reshape(3 * C, 16 * C)
    # Row offset -1 only feeds phase 0; +1 only feeds phase 3.
    wm = jnp.transpose(weff[0, :, 0], (1, 2, 0, 3)).reshape(3 * C, 4 * C)
    wp = jnp.transpose(weff[3, :, 2], (1, 2, 0, 3)).reshape(3 * C, 4 * C)
    w0 = w0.astype(jnp.bfloat16)
    wm = wm.astype(jnp.bfloat16)
    wp = wp.astype(jnp.bfloat16)
    b16 = jnp.tile(bias.astype(jnp.float32), 16).reshape(1, 16 * C)

    # ---- input plumbing: NCHW -> NHWC, column im2col (K = 3C), row tiles ----
    x_nhwc = jnp.transpose(x, (0, 2, 3, 1)).astype(jnp.bfloat16)
    x_pad = jnp.pad(x_nhwc, ((0, 0), (1, 1), (1, 1), (0, 0)))
    x_im2col = jnp.concatenate(
        [x_pad[:, :, 0:W], x_pad[:, :, 1:W + 1], x_pad[:, :, 2:W + 2]], axis=-1)
    # Overlapping row windows (1-row halo top/bottom).
    # TODO(synk): for very large H, express the halo via manual DMA instead of
    # materializing the (tile_rows+2)/tile_rows row duplication in HBM.
    x_tiles = jnp.stack(
        [x_im2col[:, t * tile_rows: t * tile_rows + tile_rows + 2]
         for t in range(n_t)], axis=1)                 # (B, n_t, th+2, W, 3C)

    kernel = functools.partial(_upsample4x_kernel, th=tile_rows, w=W, c=C)
    flops = 2 * B * H * W * (3 * C) * (16 * C + 4 * C + 4 * C)
    bytes_accessed = int(x_tiles.size * 2 + (w0.size + wm.size + wp.size) * 2
                         + b16.size * 4 + B * 16 * H * W * C * out_itemsize)

    out = pl.pallas_call(
        kernel,
        out_shape=jax.ShapeDtypeStruct((B, H, 4, W, 4 * C), x.dtype),
        grid_spec=pltpu.PrefetchScalarGridSpec(
            num_scalar_prefetch=0,
            grid=(B, n_t),
            in_specs=[
                pl.BlockSpec((1, 1, tile_rows + 2, W, 3 * C),
                             lambda b, t: (b, t, 0, 0, 0)),
                pl.BlockSpec((3 * C, 16 * C), lambda b, t: (0, 0)),
                pl.BlockSpec((3 * C, 4 * C), lambda b, t: (0, 0)),
                pl.BlockSpec((3 * C, 4 * C), lambda b, t: (0, 0)),
                pl.BlockSpec((1, 16 * C), lambda b, t: (0, 0)),
            ],
            out_specs=pl.BlockSpec((1, tile_rows, 4, W, 4 * C),
                                   lambda b, t: (b, t, 0, 0, 0)),
        ),
        compiler_params=pltpu.CompilerParams(
            dimension_semantics=("parallel", "parallel"),
            vmem_limit_bytes=vmem_limit),
        cost_estimate=pl.CostEstimate(flops=int(flops), transcendentals=0,
                                      bytes_accessed=bytes_accessed),
    )(x_tiles, w0, wm, wp, b16)

    # (B, H, 4, W, 4C) already has NHWC memory order -> free reshape.
    out_nhwc = out.reshape(B, 4 * H, 4 * W, C)
    if channels_last:
        return out_nhwc
    # TODO(synk): keep NHWC downstream (channels_last=True) to skip this extra
    # full read+write pass over the 16x-sized output.
    return jnp.transpose(out_nhwc, (0, 3, 1, 2))


if __name__ == "__main__":
    B, C, H, W = 2, 32, 16, 16
    key = jax.random.PRNGKey(0)
    kx, kw, kb = jax.random.split(key, 3)
    x = jax.random.normal(kx, (B, C, H, W), dtype=jnp.float32)
    weight = jax.random.normal(kw, (C, C, 3, 3), dtype=jnp.float32) / (3.0 * math.sqrt(C))
    bias = 0.1 * jax.random.normal(kb, (C,), dtype=jnp.float32)

    # Reference: nearest 4x upsample + 3x3 same-padding conv (PyTorch forward).
    u = jnp.repeat(jnp.repeat(x, 4, axis=2), 4, axis=3)
    ref = jax.lax.conv_general_dilated(
        u, weight, window_strides=(1, 1), padding=((1, 1), (1, 1)),
        dimension_numbers=('NCHW', 'OIHW', 'NCHW'),
        precision=jax.lax.Precision.HIGHEST) + bias[None, :, None, None]

    # Auto-picked tile (exercises per-generation VMEM budgeting).
    y = jax.block_until_ready(upsample4x(x, weight, bias))
    assert y.shape == (B, C, 4 * H, 4 * W)
    err = float(jnp.max(jnp.abs(y - ref)))
    assert err < 3e-2, f"auto-tile max abs err {err}"  # bf16 operand tolerance

    # Explicit 2-row-tile grid: exercises the halo + multi-step pipeline path.
    y2 = jax.block_until_ready(upsample4x(x, weight, bias, tile_rows=8))
    err2 = float(jnp.max(jnp.abs(y2 - ref)))
    assert err2 < 3e-2, f"tiled max abs err {err2}"

    print("KERNEL_OK")
</pallas_src>

<mosaic_0001>
module attributes {stable_mosaic.version = 11 : i64} {
  func.func @_upsample4x_kernel(%arg0: i32, %arg1: i32, %arg2: memref<1x1x18x16x96xbf16, #tpu.memory_space<vmem>>, %arg3: memref<96x512xbf16, #tpu.memory_space<vmem>>, %arg4: memref<96x128xbf16, #tpu.memory_space<vmem>>, %arg5: memref<96x128xbf16, #tpu.memory_space<vmem>>, %arg6: memref<1x512xf32, #tpu.memory_space<vmem>>, %arg7: memref<1x16x4x16x128xf32, #tpu.memory_space<vmem>>) attributes {dimension_semantics = [#tpu.dimension_semantics<parallel>, #tpu.dimension_semantics<parallel>], iteration_bounds = array<i64: 2, 1>, scalar_prefetch = 0 : i64, scratch_operands = 0 : i64, tpu.core_type = #tpu.core_type<tc>, window_params = [{transform_indices = @transform_0, window_bounds = array<i64: 1, 1, 18, 16, 96>}, {pipeline_mode = #tpu.pipeline_mode<synchronous>, transform_indices = @transform_1, window_bounds = array<i64: 96, 512>}, {pipeline_mode = #tpu.pipeline_mode<synchronous>, transform_indices = @transform_2, window_bounds = array<i64: 96, 128>}, {pipeline_mode = #tpu.pipeline_mode<synchronous>, transform_indices = @transform_3, window_bounds = array<i64: 96, 128>}, {pipeline_mode = #tpu.pipeline_mode<synchronous>, transform_indices = @transform_4, window_bounds = array<i64: 1, 512>}, {transform_indices = @transform_5, window_bounds = array<i64: 1, 16, 4, 16, 128>}]} {
    %c0 = arith.constant 0 : index
    %c0_0 = arith.constant 0 : index
    %c0_1 = arith.constant 0 : index
    %c0_2 = arith.constant 0 : index
    %c0_3 = arith.constant 0 : index
    %0 = vector.load %arg2[%c0, %c0_0, %c0_1, %c0_2, %c0_3] : memref<1x1x18x16x96xbf16, #tpu.memory_space<vmem>>, vector<1x1x18x16x96xbf16>
    %1 = vector.shape_cast %0 : vector<1x1x18x16x96xbf16> to vector<18x16x96xbf16>
    %2 = vector.extract_strided_slice %1 {offsets = [1, 0, 0], sizes = [16, 16, 96], strides = [1, 1, 1]} : vector<18x16x96xbf16> to vector<16x16x96xbf16>
    %3 = vector.shape_cast %2 : vector<16x16x96xbf16> to vector<256x96xbf16>
    %4 = vector.extract_strided_slice %1 {offsets = [0, 0, 0], sizes = [16, 16, 96], strides = [1, 1, 1]} : vector<18x16x96xbf16> to vector<16x16x96xbf16>
    %5 = vector.shape_cast %4 : vector<16x16x96xbf16> to vector<256x96xbf16>
    %6 = vector.extract_strided_slice %1 {offsets = [2, 0, 0], sizes = [16, 16, 96], strides = [1, 1, 1]} : vector<18x16x96xbf16> to vector<16x16x96xbf16>
    %7 = vector.shape_cast %6 : vector<16x16x96xbf16> to vector<256x96xbf16>
    %c0_4 = arith.constant 0 : index
    %c0_5 = arith.constant 0 : index
    %8 = vector.load %arg3[%c0_4, %c0_5] : memref<96x512xbf16, #tpu.memory_space<vmem>>, vector<96x512xbf16>
    %cst = arith.constant dense<0.000000e+00> : vector<256x512xf32>
    %9 = tpu.matmul %3, %8, %cst {dimension_numbers = #tpu.dot_dimension_numbers<[1], [0], [0], [1], [0, 0, 1, 1], [], []>} : vector<256x96xbf16>, vector<96x512xbf16>, vector<256x512xf32> -> vector<256x512xf32>
    %c0_6 = arith.constant 0 : index
    %c0_7 = arith.constant 0 : index
    %10 = vector.load %arg4[%c0_6, %c0_7] : memref<96x128xbf16, #tpu.memory_space<vmem>>, vector<96x128xbf16>
    %cst_8 = arith.constant dense<0.000000e+00> : vector<256x128xf32>
    %11 = tpu.matmul %5, %10, %cst_8 {dimension_numbers = #tpu.dot_dimension_numbers<[1], [0], [0], [1], [0, 0, 1, 1], [], []>} : vector<256x96xbf16>, vector<96x128xbf16>, vector<256x128xf32> -> vector<256x128xf32>
    %c0_9 = arith.constant 0 : index
    %c0_10 = arith.constant 0 : index
    %12 = vector.load %arg5[%c0_9, %c0_10] : memref<96x128xbf16, #tpu.memory_space<vmem>>, vector<96x128xbf16>
    %cst_11 = arith.constant dense<0.000000e+00> : vector<256x128xf32>
    %13 = tpu.matmul %7, %12, %cst_11 {dimension_numbers = #tpu.dot_dimension_numbers<[1], [0], [0], [1], [0, 0, 1, 1], [], []>} : vector<256x96xbf16>, vector<96x128xbf16>, vector<256x128xf32> -> vector<256x128xf32>
    %c0_12 = arith.constant 0 : index
    %c0_13 = arith.constant 0 : index
    %14 = vector.load %arg6[%c0_12, %c0_13] : memref<1x512xf32, #tpu.memory_space<vmem>>, vector<1x512xf32>
    %15 = vector.broadcast %14 : vector<1x512xf32> to vector<256x512xf32>
    %16 = arith.addf %9, %15 : vector<256x512xf32>
    %17 = vector.extract_strided_slice %16 {offsets = [0, 0], sizes = [256, 128], strides = [1, 1]} : vector<256x512xf32> to vector<256x128xf32>
    %18 = arith.addf %17, %11 : vector<256x128xf32>
    %19 = vector.shape_cast %18 : vector<256x128xf32> to vector<16x16x128xf32>
    %c0_14 = arith.constant 0 : index
    %c0_15 = arith.constant 0 : index
    %c0_16 = arith.constant 0 : index
    %c0_17 = arith.constant 0 : index
    %c0_18 = arith.constant 0 : index
    %20 = vector.load %arg7[%c0_14, %c0_15, %c0_16, %c0_17, %c0_18] : memref<1x16x4x16x128xf32, #tpu.memory_space<vmem>>, vector<1x16x1x16x128xf32>
    %21 = vector.shape_cast %20 : vector<1x16x1x16x128xf32> to vector<16x16x128xf32>
    %22 = vector.shape_cast %19 : vector<16x16x128xf32> to vector<1x16x1x16x128xf32>
    tpu.vector_store %arg7[%c0_14, %c0_15, %c0_16, %c0_17, %c0_18], %22 {strides = array<i32>} : memref<1x16x4x16x128xf32, #tpu.memory_space<vmem>>, vector<1x16x1x16x128xf32>,
    %23 = vector.extract_strided_slice %16 {offsets = [0, 128], sizes = [256, 128], strides = [1, 1]} : vector<256x512xf32> to vector<256x128xf32>
    %24 = vector.shape_cast %23 : vector<256x128xf32> to vector<16x16x128xf32>
    %c0_19 = arith.constant 0 : index
    %c0_20 = arith.constant 0 : index
    %c1 = arith.constant 1 : index
    %c0_21 = arith.constant 0 : index
    %c0_22 = arith.constant 0 : index
    %25 = vector.load %arg7[%c0_19, %c0_20, %c1, %c0_21, %c0_22] : memref<1x16x4x16x128xf32, #tpu.memory_space<vmem>>, vector<1x16x1x16x128xf32>
    %26 = vector.shape_cast %25 : vector<1x16x1x16x128xf32> to vector<16x16x128xf32>
    %27 = vector.shape_cast %24 : vector<16x16x128xf32> to vector<1x16x1x16x128xf32>
    tpu.vector_store %arg7[%c0_19, %c0_20, %c1, %c0_21, %c0_22], %27 {strides = array<i32>} : memref<1x16x4x16x128xf32, #tpu.memory_space<vmem>>, vector<1x16x1x16x128xf32>,
    %28 = vector.extract_strided_slice %16 {offsets = [0, 256], sizes = [256, 128], strides = [1, 1]} : vector<256x512xf32> to vector<256x128xf32>
    %29 = vector.shape_cast %28 : vector<256x128xf32> to vector<16x16x128xf32>
    %c0_23 = arith.constant 0 : index
    %c0_24 = arith.constant 0 : index
    %c2 = arith.constant 2 : index
    %c0_25 = arith.constant 0 : index
    %c0_26 = arith.constant 0 : index
    %30 = vector.load %arg7[%c0_23, %c0_24, %c2, %c0_25, %c0_26] : memref<1x16x4x16x128xf32, #tpu.memory_space<vmem>>, vector<1x16x1x16x128xf32>
    %31 = vector.shape_cast %30 : vector<1x16x1x16x128xf32> to vector<16x16x128xf32>
    %32 = vector.shape_cast %29 : vector<16x16x128xf32> to vector<1x16x1x16x128xf32>
    tpu.vector_store %arg7[%c0_23, %c0_24, %c2, %c0_25, %c0_26], %32 {strides = array<i32>} : memref<1x16x4x16x128xf32, #tpu.memory_space<vmem>>, vector<1x16x1x16x128xf32>,
    %33 = vector.extract_strided_slice %16 {offsets = [0, 384], sizes = [256, 128], strides = [1, 1]} : vector<256x512xf32> to vector<256x128xf32>
    %34 = arith.addf %33, %13 : vector<256x128xf32>
    %35 = vector.shape_cast %34 : vector<256x128xf32> to vector<16x16x128xf32>
    %c0_27 = arith.constant 0 : index
    %c0_28 = arith.constant 0 : index
    %c3 = arith.constant 3 : index
    %c0_29 = arith.constant 0 : index
    %c0_30 = arith.constant 0 : index
    %36 = vector.load %arg7[%c0_27, %c0_28, %c3, %c0_29, %c0_30] : memref<1x16x4x16x128xf32, #tpu.memory_space<vmem>>, vector<1x16x1x16x128xf32>
    %37 = vector.shape_cast %36 : vector<1x16x1x16x128xf32> to vector<16x16x128xf32>
    %38 = vector.shape_cast %35 : vector<16x16x128xf32> to vector<1x16x1x16x128xf32>
    tpu.vector_store %arg7[%c0_27, %c0_28, %c3, %c0_29, %c0_30], %38 {strides = array<i32>} : memref<1x16x4x16x128xf32, #tpu.memory_space<vmem>>, vector<1x16x1x16x128xf32>,
    return
  }
  func.func @transform_0(%arg0: i32, %arg1: i32) -> (i32, i32, i32, i32, i32) {
    %c0_i32 = arith.constant 0 : i32
    %c0_i32_0 = arith.constant 0 : i32
    %c0_i32_1 = arith.constant 0 : i32
    %c0_i32_2 = arith.constant 0 : i32
    return %arg0, %arg1, %c0_i32, %c0_i32_0, %c0_i32_1 : i32, i32, i32, i32, i32
  }
  func.func @transform_1(%arg0: i32, %arg1: i32) -> (i32, i32) {
    %c0_i32 = arith.constant 0 : i32
    %c0_i32_0 = arith.constant 0 : i32
    %c0_i32_1 = arith.constant 0 : i32
    return %c0_i32, %c0_i32_0 : i32, i32
  }
  func.func @transform_2(%arg0: i32, %arg1: i32) -> (i32, i32) {
    %c0_i32 = arith.constant 0 : i32
    %c0_i32_0 = arith.constant 0 : i32
    %c0_i32_1 = arith.constant 0 : i32
    return %c0_i32, %c0_i32_0 : i32, i32
  }
  func.func @transform_3(%arg0: i32, %arg1: i32) -> (i32, i32) {
    %c0_i32 = arith.constant 0 : i32
    %c0_i32_0 = arith.constant 0 : i32
    %c0_i32_1 = arith.constant 0 : i32
    return %c0_i32, %c0_i32_0 : i32, i32
  }
  func.func @transform_4(%arg0: i32, %arg1: i32) -> (i32, i32) {
    %c0_i32 = arith.constant 0 : i32
    %c0_i32_0 = arith.constant 0 : i32
    %c0_i32_1 = arith.constant 0 : i32
    return %c0_i32, %c0_i32_0 : i32, i32
  }
  func.func @transform_5(%arg0: i32, %arg1: i32) -> (i32, i32, i32, i32, i32) {
    %c0_i32 = arith.constant 0 : i32
    %c0_i32_0 = arith.constant 0 : i32
    %c0_i32_1 = arith.constant 0 : i32
    %c0_i32_2 = arith.constant 0 : i32
    return %arg0, %arg1, %c0_i32, %c0_i32_0, %c0_i32_1 : i32, i32, i32, i32, i32
  }
}

</mosaic_0001>

<llo_original>
// kernel: tpu_custom_call.1
$region0: #{tpu_custom_call.1}
  #allocation0 [shape = 'u32[]', space=smem, size = 0x4, offset = 0x4, fixed_abs, tag = 'smem constant byte address 0x4 - core index']
  #allocation1 [shape = 'u32[72,128]{1,0:T(1,128)}', space=vmem, size = 0x9000, scoped, tag = 'internal scratch']
  %s0 = inlined_call_operand.hbm [shape: bf16[2,1,18,16,96], index: 0, kind: input, shape index: {}]
  %s1 = inlined_call_operand.hbm [shape: bf16[96,512], index: 1, kind: input, shape index: {}]
  %s2 = inlined_call_operand.hbm [shape: bf16[96,128], index: 2, kind: input, shape index: {}]
  %s3 = inlined_call_operand.hbm [shape: bf16[96,128], index: 3, kind: input, shape index: {}]
  %s4 = inlined_call_operand.hbm [shape: f32[1,512], index: 4, kind: input, shape index: {}]
  %s5 = inlined_call_operand.hbm [shape: f32[2,16,4,16,128], index: 5, kind: output, shape index: {}]
  %s6 = sld [smem:[#allocation0]]
  $region73: #{tpu_custom_call.1} parent=0
    _
  %s8 = ssub.s32 1, %s6
  %s9 = scalar_select 0, %s8, %s6
  $region1: #{tpu_custom_call.1} parent=0
    #allocation2 [shape = 'u8[147456]{0}', space=vmem, size = 0x24000, scoped, tag = 'input window, operand 0']
    #allocation3 [shape = 's32[2]{0}', space=sflag, size = 0x8, scoped, tag = 'scoped memory for tpu_custom_call.1']
    #allocation4 [shape = 's32[2]{0}', space=sflag, size = 0x8, scoped, tag = 'scoped memory for tpu_custom_call.1']
    #allocation5 [shape = 'u8[98304]{0}', space=vmem, size = 0x18000, scoped, tag = 'input window, operand 1, single buffered']
    #allocation6 [shape = 's32[1]{0}', space=sflag, size = 0x4, scoped, tag = 'scoped memory for tpu_custom_call.1']
    #allocation7 [shape = 'u8[24576]{0}', space=vmem, size = 0x6000, scoped, tag = 'input window, operand 2, single buffered']
    #allocation8 [shape = 'u8[24576]{0}', space=vmem, size = 0x6000, scoped, tag = 'input window, operand 3, single buffered']
    #allocation9 [shape = 's32[1]{0}', space=sflag, size = 0x4, scoped, tag = 'scoped memory for tpu_custom_call.1']
    #allocation10 [shape = 'u8[2048]{0}', space=vmem, size = 0x800, scoped, tag = 'input window, operand 4, single buffered']
    #allocation11 [shape = 'u8[1048576]{0}', space=vmem, size = 0x100000, scoped, tag = 'output window, operand 0']
    %10 = vsyncpa [#allocation3], 0
    %s11 = scalar_lea.sflag [#allocation3], 1
    %12 = vsyncpa %s11, 0
    %13 = vsyncpa [#allocation6], 0
    %14 = vsyncpa [#allocation9], 0
    %15 = vsyncpa [#allocation4], 0
    %s16 = scalar_lea.sflag [#allocation4], 1
    %17 = vsyncpa %s16, 0
    loop: start=0, step=1, limit=4
    $region2: #{tpu_custom_call.1} parent=1 // loop_pre_header
      _
    $region3: #{tpu_custom_call.1} parent=1 // loop_header
      %s19 = sphi 0, %s23
      %p20 = scmp.ge.s32.totalorder %s19, 4
      %s26 = sphi 0, %s38
      %s27 = sphi 0, %s34
      %s28 = sphi 0, %s26
      %s29 = sphi 0, %s27
      %s30 = sphi 0, %s28
      %s31 = sphi 0, %s29
      %s43 = sphi 0, %s45
      %s46 = sphi 0, %s43
      %s47 = sphi 0, %s46
      %s63 = sphi 0, %s47
      %s67 = sphi 0, %s67
      %s69 = sphi 0, %s67
      %s70 = sphi 0, %s69
      %s84 = sphi 0, %s70
      %s88 = sphi 0, %s88
      %s90 = sphi 0, %s88
      %s91 = sphi 0, %s90
      %s105 = sphi 0, %s91
      %s109 = sphi 0, %s109
      %s111 = sphi 0, %s109
      %s112 = sphi 0, %s111
      %s126 = sphi 0, %s112
      %s130 = sphi 0, %s130
      %s132 = sphi 0, %s130
      %s133 = sphi 0, %s132
      %s147 = sphi 0, %s133
      %s155 = sphi 0, %s157
      %s158 = sphi 0, %s155
      %s159 = sphi 0, %s158
      %s175 = sphi 0, %s159
    $region4: #{tpu_custom_call.1} parent=1 // loop_header_branch
      %22 = sbr.rel (%p20) target = $region8
    $region5: #{tpu_custom_call.1} parent=1 // loop_body
      %s24 = ssub.s32 %s19, 1
      %s25 = ssub.s32 %s19, 2
      %s32 = sadd.s32 1, %s27
      %p33 = scmp.ge.s32.totalorder %s32, 1
      %s34 = scalar_select %p33, 0, %s32
      %s35 = sadd.s32 1, %s26
      %s36 = scalar_select %p33, %s35, %s26
      %p37 = scmp.ge.s32.totalorder %s36, 2
      %s38 = scalar_select %p37, 0, %s36
      %s39 = ssub.s32 %s26, %s38
      %s40 = ssub.s32 %s27, %s34
      %s41 = sor.u32 %s39, %s40
      %p42 = scmp.eq.s32.totalorder %s41, 0
      %s44 = sadd.s32 %s43, 1
      %s45 = scalar_select %p42, %s43, %s44
      %p48 = pneg %p42
      %p49 = scmp.eq.s32.totalorder %s19, 1
      %p50 = por %p48, %p49
      %p51 = scmp.ne.s32.totalorder %s43, %s46
      %p52 = scmp.eq.s32.totalorder %s19, 0
      %p53 = por %p51, %p52
      %p54 = scmp.ne.s32.totalorder %s43, %s46
      %p55 = scmp.eq.s32.totalorder %s24, 1
      %p56 = por %p54, %p55
      %p57 = scmp.ne.s32.totalorder %s46, %s47
      %p58 = scmp.eq.s32.totalorder %s24, 0
      %p59 = por %p57, %p58
      %p60 = scmp.ne.s32.totalorder %s46, %s47
      %p61 = scmp.eq.s32.totalorder %s25, 1
      %p62 = por %p60, %p61
      %p64 = scmp.ne.s32.totalorder %s47, %s63
      %p65 = scmp.eq.s32.totalorder %s25, 0
      %p66 = por %p64, %p65
      %s68 = sadd.s32 %s67, 1
      %p71 = scmp.eq.s32.totalorder %s19, 1
      %p72 = scmp.ne.s32.totalorder %s67, %s69
      %p73 = scmp.eq.s32.totalorder %s19, 0
      %p74 = por %p72, %p73
      %p75 = scmp.ne.s32.totalorder %s67, %s69
      %p76 = scmp.eq.s32.totalorder %s24, 1
      %p77 = por %p75, %p76
      %p78 = scmp.ne.s32.totalorder %s69, %s70
      %p79 = scmp.eq.s32.totalorder %s24, 0
      %p80 = por %p78, %p79
      %p81 = scmp.ne.s32.totalorder %s69, %s70
      %p82 = scmp.eq.s32.totalorder %s25, 1
      %p83 = por %p81, %p82
      %p85 = scmp.ne.s32.totalorder %s70, %s84
      %p86 = scmp.eq.s32.totalorder %s25, 0
      %p87 = por %p85, %p86
      %s89 = sadd.s32 %s88, 1
      %p92 = scmp.eq.s32.totalorder %s19, 1
      %p93 = scmp.ne.s32.totalorder %s88, %s90
      %p94 = scmp.eq.s32.totalorder %s19, 0
      %p95 = por %p93, %p94
      %p96 = scmp.ne.s32.totalorder %s88, %s90
      %p97 = scmp.eq.s32.totalorder %s24, 1
      %p98 = por %p96, %p97
      %p99 = scmp.ne.s32.totalorder %s90, %s91
      %p100 = scmp.eq.s32.totalorder %s24, 0
      %p101 = por %p99, %p100
      %p102 = scmp.ne.s32.totalorder %s90, %s91
      %p103 = scmp.eq.s32.totalorder %s25, 1
      %p104 = por %p102, %p103
      %p106 = scmp.ne.s32.totalorder %s91, %s105
      %p107 = scmp.eq.s32.totalorder %s25, 0
      %p108 = por %p106, %p107
      %s110 = sadd.s32 %s109, 1
      %p113 = scmp.eq.s32.totalorder %s19, 1
      %p114 = scmp.ne.s32.totalorder %s109, %s111
      %p115 = scmp.eq.s32.totalorder %s19, 0
      %p116 = por %p114, %p115
      %p117 = scmp.ne.s32.totalorder %s109, %s111
      %p118 = scmp.eq.s32.totalorder %s24, 1
      %p119 = por %p117, %p118
      %p120 = scmp.ne.s32.totalorder %s111, %s112
      %p121 = scmp.eq.s32.totalorder %s24, 0
      %p122 = por %p120, %p121
      %p123 = scmp.ne.s32.totalorder %s111, %s112
      %p124 = scmp.eq.s32.totalorder %s25, 1
      %p125 = por %p123, %p124
      %p127 = scmp.ne.s32.totalorder %s112, %s126
      %p128 = scmp.eq.s32.totalorder %s25, 0
      %p129 = por %p127, %p128
      %s131 = sadd.s32 %s130, 1
      %p134 = scmp.eq.s32.totalorder %s19, 1
      %p135 = scmp.ne.s32.totalorder %s130, %s132
      %p136 = scmp.eq.s32.totalorder %s19, 0
      %p137 = por %p135, %p136
      %p138 = scmp.ne.s32.totalorder %s130, %s132
      %p139 = scmp.eq.s32.totalorder %s24, 1
      %p140 = por %p138, %p139
      %p141 = scmp.ne.s32.totalorder %s132, %s133
      %p142 = scmp.eq.s32.totalorder %s24, 0
      %p143 = por %p141, %p142
      %p144 = scmp.ne.s32.totalorder %s132, %s133
      %p145 = scmp.eq.s32.totalorder %s25, 1
      %p146 = por %p144, %p145
      %p148 = scmp.ne.s32.totalorder %s133, %s147
      %p149 = scmp.eq.s32.totalorder %s25, 0
      %p150 = por %p148, %p149
      %s151 = ssub.s32 %s26, %s38
      %s152 = ssub.s32 %s27, %s34
      %s153 = sor.u32 %s151, %s152
      %p154 = scmp.eq.s32.totalorder %s153, 0
      %s156 = sadd.s32 %s155, 1
      %s157 = scalar_select %p154, %s155, %s156
      %p160 = pneg %p154
      %p161 = scmp.eq.s32.totalorder %s19, 1
      %p162 = por %p160, %p161
      %p163 = scmp.ne.s32.totalorder %s155, %s158
      %p164 = scmp.eq.s32.totalorder %s19, 0
      %p165 = por %p163, %p164
      %p166 = scmp.ne.s32.totalorder %s155, %s158
      %p167 = scmp.eq.s32.totalorder %s24, 1
      %p168 = por %p166, %p167
      %p169 = scmp.ne.s32.totalorder %s158, %s159
      %p170 = scmp.eq.s32.totalorder %s24, 0
      %p171 = por %p169, %p170
      %p172 = scmp.ne.s32.totalorder %s158, %s159
      %p173 = scmp.eq.s32.totalorder %s25, 1
      %p174 = por %p172, %p173
      %p176 = scmp.ne.s32.totalorder %s159, %s175
      %p177 = scmp.eq.s32.totalorder %s25, 0
      %p178 = por %p176, %p177
      %p179 = scmp.le.s32.totalorder 1, %s19
      %p180 = scmp.lt.s32.totalorder %s19, 3
      %p181 = pnand %p179, %p180
      %p182 = pneg %p181
      // Predicated region
      $region9: #{tpu_custom_call.1} parent=5 // pred_check
        _
      $region10: #{tpu_custom_call.1} parent=5 // pred_check_branch
        %184 = sbr.rel (%p181) target = $region12
      $region11: #{tpu_custom_call.1} parent=5 // pred_region
        %s185 = ssub.s32 %s19, 1
        // Predicated region
        $region13: #{tpu_custom_call.1} parent=11 // pred_check
          %p186 = pneg %p80
        $region14: #{tpu_custom_call.1} parent=11 // pred_check_branch
          %188 = sbr.rel (%p186) target = $region16
        $region15: #{tpu_custom_call.1} parent=11 // pred_region
          %190 = vsyncadd [#allocation6], 0
          %s191 = sshll.u32 %s1, 4
          %s192 = int_to_ptr.hbm [resolvable:$true] %s191
          %s193 = sshll.u32 [#allocation5], 4
          %s194 = int_to_ptr.vmem [resolvable:$true] %s193
          %199 = dma.hbm_to_vmem [thread:$0]  %s192, 3072, %s194, [#allocation6], 256, 256, 16
        $region16: #{tpu_custom_call.1} parent=11 // pred_fallthru
          _
        // Predicated region
        $region17: #{tpu_custom_call.1} parent=11 // pred_check
          %p200 = pneg %p101
        $region18: #{tpu_custom_call.1} parent=11 // pred_check_branch
          %202 = sbr.rel (%p200) target = $region20
        $region19: #{tpu_custom_call.1} parent=11 // pred_region
          %204 = vsyncadd [#allocation6], 0
          %s205 = sshll.u32 %s2, 4
          %s206 = int_to_ptr.hbm [resolvable:$true] %s205
          %s207 = sshll.u32 [#allocation7], 4
          %s208 = int_to_ptr.vmem [resolvable:$true] %s207
          %213 = dma.hbm_to_vmem [thread:$0]  %s206, 768, %s208, [#allocation6], 64, 64, 4
        $region20: #{tpu_custom_call.1} parent=11 // pred_fallthru
          _
        // Predicated region
        $region21: #{tpu_custom_call.1} parent=11 // pred_check
          %p214 = pneg %p122
        $region22: #{tpu_custom_call.1} parent=11 // pred_check_branch
          %216 = sbr.rel (%p214) target = $region24
        $region23: #{tpu_custom_call.1} parent=11 // pred_region
          %218 = vsyncadd [#allocation9], 0
          %s219 = sshll.u32 %s3, 4
          %s220 = int_to_ptr.hbm [resolvable:$true] %s219
          %s221 = sshll.u32 [#allocation8], 4
          %s222 = int_to_ptr.vmem [resolvable:$true] %s221
          %227 = dma.hbm_to_vmem [thread:$0]  %s220, 768, %s222, [#allocation9], 64, 64, 4
        $region24: #{tpu_custom_call.1} parent=11 // pred_fallthru
          _
        // Predicated region
        $region25: #{tpu_custom_call.1} parent=11 // pred_check
          %p228 = pneg %p143
        $region26: #{tpu_custom_call.1} parent=11 // pred_check_branch
          %230 = sbr.rel (%p228) target = $region28
        $region27: #{tpu_custom_call.1} parent=11 // pred_region
          %232 = vsyncadd [#allocation9], 0
          %s234 = sshll.u32 %s4, 4
          %s235 = int_to_ptr.hbm [resolvable:$true] %s234
          %s236 = sshll.u32 [#allocation10], 4
          %s237 = int_to_ptr.vmem [resolvable:$true] %s236
          %239 = dma.hbm_to_vmem [thread:$0]  %s235, 64, %s237, [#allocation9]
        $region28: #{tpu_custom_call.1} parent=11 // pred_fallthru
          _
      $region12: #{tpu_custom_call.1} parent=5 // pred_fallthru
        _
      %p240 = scmp.lt.s32.totalorder %s19, 2
      // Predicated region
      $region29: #{tpu_custom_call.1} parent=5 // pred_check
        %p241 = pneg %p240
      $region30: #{tpu_custom_call.1} parent=5 // pred_check_branch
        %243 = sbr.rel (%p241) target = $region32
      $region31: #{tpu_custom_call.1} parent=5 // pred_region
        // Predicated region
        $region33: #{tpu_custom_call.1} parent=31 // pred_check
          %p244 = pneg %p53
        $region34: #{tpu_custom_call.1} parent=31 // pred_check_branch
          %246 = sbr.rel (%p244) target = $region36
        $region35: #{tpu_custom_call.1} parent=31 // pred_region
          %s247 = sand.u32 %s43, 1
          %s248 = scalar_lea.sflag [#allocation3], %s247
          %s249 = sand.u32 %s43, 1
          %s250 = smul.addr %s249, 144
          %s251 = scalar_lea.vmem [#allocation2], %s250
          %253 = vsyncadd %s248, 0
          %s254 = smul.addr %s27, 36
          %s255 = smul.addr %s26, 36
          %s256 = sadd.s32 %s254, %s255
          %s257 = smul.addr %s256, 4
          %s258 = scalar_lea.hbm %s0, %s257
          %s259 = sshll.u32 %s258, 4
          %s260 = int_to_ptr.hbm [resolvable:$true] %s259
          %s261 = sshll.u32 %s251, 4
          %s262 = int_to_ptr.vmem [resolvable:$true] %s261
          %267 = dma.hbm_to_vmem [thread:$0]  %s260, 2304, %s262, %s248, 64, 64, 4
        $region36: #{tpu_custom_call.1} parent=31 // pred_fallthru
          _
      $region32: #{tpu_custom_call.1} parent=5 // pred_fallthru
        _
      %p268 = scmp.le.s32.totalorder 1, %s19
      %p269 = scmp.lt.s32.totalorder %s19, 3
      %p270 = pnand %p268, %p269
      %p271 = pneg %p270
      // Predicated region
      $region37: #{tpu_custom_call.1} parent=5 // pred_check
        _
      $region38: #{tpu_custom_call.1} parent=5 // pred_check_branch
        %273 = sbr.rel (%p270) target = $region40
      $region39: #{tpu_custom_call.1} parent=5 // pred_region
        %s274 = ssub.s32 %s19, 1
        %s275 = sand.u32 %s46, 1
        %s276 = scalar_lea.sflag [#allocation3], %s275
        %s277 = sand.u32 %s46, 1
        %s278 = smul.addr %s277, 144
        %s279 = scalar_lea.vmem [#allocation2], %s278
        // Predicated region
        $region41: #{tpu_custom_call.1} parent=39 // pred_check
          %p280 = pneg %p59
        $region42: #{tpu_custom_call.1} parent=39 // pred_check_branch
          %282 = sbr.rel (%p280) target = $region44
        $region43: #{tpu_custom_call.1} parent=39 // pred_region
          %284 = dma.done %s276, 2304
        $region44: #{tpu_custom_call.1} parent=39 // pred_fallthru
          _
        // Predicated region
        $region45: #{tpu_custom_call.1} parent=39 // pred_check
          %p285 = pneg %p80
        $region46: #{tpu_custom_call.1} parent=39 // pred_check_branch
          %287 = sbr.rel (%p285) target = $region48
        $region47: #{tpu_custom_call.1} parent=39 // pred_region
          %289 = dma.done [#allocation6], 3072
        $region48: #{tpu_custom_call.1} parent=39 // pred_fallthru
          _
        // Predicated region
        $region49: #{tpu_custom_call.1} parent=39 // pred_check
          %p290 = pneg %p101
        $region50: #{tpu_custom_call.1} parent=39 // pred_check_branch
          %292 = sbr.rel (%p290) target = $region52
        $region51: #{tpu_custom_call.1} parent=39 // pred_region
          %294 = dma.done [#allocation6], 768
        $region52: #{tpu_custom_call.1} parent=39 // pred_fallthru
          _
        // Predicated region
        $region53: #{tpu_custom_call.1} parent=39 // pred_check
          %p295 = pneg %p122
        $region54: #{tpu_custom_call.1} parent=39 // pred_check_branch
          %297 = sbr.rel (%p295) target = $region56
        $region55: #{tpu_custom_call.1} parent=39 // pred_region
          %299 = dma.done [#allocation9], 768
        $region56: #{tpu_custom_call.1} parent=39 // pred_fallthru
          _
        // Predicated region
        $region57: #{tpu_custom_call.1} parent=39 // pred_check
          %p300 = pneg %p143
        $region58: #{tpu_custom_call.1} parent=39 // pred_check_branch
          %302 = sbr.rel (%p300) target = $region60
        $region59: #{tpu_custom_call.1} parent=39 // pred_region
          %304 = dma.done [#allocation9], 64
        $region60: #{tpu_custom_call.1} parent=39 // pred_fallthru
          _
        %s305 = sand.u32 %s46, 1
        %s306 = scalar_lea.sflag [#allocation3], %s305
        %s307 = sand.u32 %s46, 1
        %s308 = smul.addr %s307, 144
        %s309 = scalar_lea.vmem [#allocation2], %s308
        %p310 = pneg %p59
        %p311 = pneg %p56
        %p312 = pneg %p80
        %p313 = pneg %p77
        %p314 = pneg %p101
        %p315 = pneg %p98
        %p316 = pneg %p122
        %p317 = pneg %p119
        %p318 = pneg %p143
        %p319 = pneg %p140
        %p320 = pneg %p171
        %p321 = pneg %p168
        %s322 = sand.u32 %s158, 1
        %s323 = scalar_lea.sflag [#allocation4], %s322
        %s324 = sand.u32 %s158, 1
        %s325 = smul.addr %s324, 1024
        %s326 = scalar_lea.vmem [#allocation11], %s325
        %s327 = smul.u32 16, %s29
        %v329 = vld [vmem:[%s279] sm:$0xf]
        %v330 = vld [vmem:[%s279 + $0x4] sm:$0xf]
        %v331 = vld [vmem:[%s279 + $0x8] sm:$0xf]
        %v332 = vld [vmem:[%s279 + $0xc] sm:$0xf]
        %v333 = vld [vmem:[%s279 + $0x10] sm:$0xf]
        %v334 = vld [vmem:[%s279 + $0x14] sm:$0xf]
        %v335 = vld [vmem:[%s279 + $0x18] sm:$0xf]
        %v336 = vld [vmem:[%s279 + $0x1c] sm:$0xf]
        %v337 = vld [vmem:[%s279 + $0x20] sm:$0xf]
        %v338 = vld [vmem:[%s279 + $0x24] sm:$0xf]
        %v339 = vld [vmem:[%s279 + $0x28] sm:$0xf]
        %v340 = vld [vmem:[%s279 + $0x2c] sm:$0xf]
        %v341 = vld [vmem:[%s279 + $0x30] sm:$0xf]
        %v342 = vld [vmem:[%s279 + $0x34] sm:$0xf]
        %v343 = vld [vmem:[%s279 + $0x38] sm:$0xf]
        %v344 = vld [vmem:[%s279 + $0x3c] sm:$0xf]
        %v345 = vld [vmem:[%s279 + $0x40] sm:$0xf]
        %v346 = vld [vmem:[%s279 + $0x44] sm:$0xf]
        %v347 = vld [vmem:[%s279 + $0x48] sm:$0xf]
        %v348 = vld [vmem:[%s279 + $0x4c] sm:$0xf]
        %v349 = vld [vmem:[%s279 + $0x50] sm:$0xf]
        %v350 = vld [vmem:[%s279 + $0x54] sm:$0xf]
        %v351 = vld [vmem:[%s279 + $0x58] sm:$0xf]
        %v352 = vld [vmem:[%s279 + $0x5c] sm:$0xf]
        %v353 = vld [vmem:[%s279 + $0x60] sm:$0xf]
        %v354 = vld [vmem:[%s279 + $0x64] sm:$0xf]
        %v355 = vld [vmem:[%s279 + $0x68] sm:$0xf]
        %v356 = vld [vmem:[%s279 + $0x6c] sm:$0xf]
        %v357 = vld [vmem:[%s279 + $0x70] sm:$0xf]
        %v358 = vld [vmem:[%s279 + $0x74] sm:$0xf]
        %v359 = vld [vmem:[%s279 + $0x78] sm:$0xf]
        %v360 = vld [vmem:[%s279 + $0x7c] sm:$0xf]
        %v361 = vld [vmem:[%s279 + $0x80] sm:$0xf]
        %v362 = vld [vmem:[%s279 + $0x84] sm:$0xf]
        %v363 = vld [vmem:[%s279 + $0x88] sm:$0xf]
        %v364 = vld [vmem:[%s279 + $0x8c] sm:$0xf]
        %v365 = vld [vmem:[#allocation5] sm:$0xff]
        %v366 = vld [vmem:[#allocation5 + $0x8] sm:$0xff]
        %v367 = vld [vmem:[#allocation5 + $0x10] sm:$0xff]
        %v368 = vld [vmem:[#allocation5 + $0x18] sm:$0xff]
        %v369 = vld [vmem:[#allocation5 + $0x20] sm:$0xff]
        %v370 = vld [vmem:[#allocation5 + $0x28] sm:$0xff]
        %v371 = vld [vmem:[#allocation5 + $0x30] sm:$0xff]
        %v372 = vld [vmem:[#allocation5 + $0x38] sm:$0xff]
        %v373 = vld [vmem:[#allocation5 + $0x40] sm:$0xff]
        %v374 = vld [vmem:[#allocation5 + $0x48] sm:$0xff]
        %v375 = vld [vmem:[#allocation5 + $0x50] sm:$0xff]
        %v376 = vld [vmem:[#allocation5 + $0x58] sm:$0xff]
        %v377 = vld [vmem:[#allocation5 + $0x60] sm:$0xff]
        %v378 = vld [vmem:[#allocation5 + $0x68] sm:$0xff]
        %v379 = vld [vmem:[#allocation5 + $0x70] sm:$0xff]
        %v380 = vld [vmem:[#allocation5 + $0x78] sm:$0xff]
        %v381 = vld [vmem:[#allocation5 + $0x80] sm:$0xff]
        %v382 = vld [vmem:[#allocation5 + $0x88] sm:$0xff]
        %v383 = vld [vmem:[#allocation5 + $0x90] sm:$0xff]
        %v384 = vld [vmem:[#allocation5 + $0x98] sm:$0xff]
        %v385 = vld [vmem:[#allocation5 + $0xa0] sm:$0xff]
        %v386 = vld [vmem:[#allocation5 + $0xa8] sm:$0xff]
        %v387 = vld [vmem:[#allocation5 + $0xb0] sm:$0xff]
        %v388 = vld [vmem:[#allocation5 + $0xb8] sm:$0xff]
        %v389 = vld [vmem:[#allocation7] sm:$0xf]
        %v390 = vld [vmem:[#allocation7 + $0x4] sm:$0xf]
        %v391 = vld [vmem:[#allocation7 + $0x8] sm:$0xf]
        %v392 = vld [vmem:[#allocation7 + $0xc] sm:$0xf]
        %v393 = vld [vmem:[#allocation7 + $0x10] sm:$0xf]
        %v394 = vld [vmem:[#allocation7 + $0x14] sm:$0xf]
        %v395 = vld [vmem:[#allocation7 + $0x18] sm:$0xf]
        %v396 = vld [vmem:[#allocation7 + $0x1c] sm:$0xf]
        %v397 = vld [vmem:[#allocation7 + $0x20] sm:$0xf]
        %v398 = vld [vmem:[#allocation7 + $0x24] sm:$0xf]
        %v399 = vld [vmem:[#allocation7 + $0x28] sm:$0xf]
        %v400 = vld [vmem:[#allocation7 + $0x2c] sm:$0xf]
        %v433 = vunpack.c.l.b16 %v329
        %v434 = vunpack.c.l.b16 %v330
        %v435 = vunpack.c.l.b16 %v331
        %v436 = vunpack.c.l.b16 %v332
        %v437 = vunpack.c.l.b16 %v333
        %v438 = vunpack.c.l.b16 %v334
        %v439 = vunpack.c.l.b16 %v335
        %v440 = vunpack.c.l.b16 %v336
        %v441 = vunpack.c.l.b16 %v337
        %v442 = vunpack.c.l.b16 %v338
        %v443 = vunpack.c.l.b16 %v339
        %v444 = vunpack.c.l.b16 %v340
        %v445 = vunpack.c.l.b16 %v341
        %v446 = vunpack.c.l.b16 %v342
        %v447 = vunpack.c.l.b16 %v343
        %v448 = vunpack.c.l.b16 %v344
        %v449 = vunpack.c.l.b16 %v345
        %v450 = vunpack.c.l.b16 %v346
        %v451 = vunpack.c.l.b16 %v347
        %v452 = vunpack.c.l.b16 %v348
        %v453 = vunpack.c.l.b16 %v349
        %v454 = vunpack.c.l.b16 %v350
        %v455 = vunpack.c.l.b16 %v351
        %v456 = vunpack.c.l.b16 %v352
        %v457 = vunpack.c.l.b16 %v353
        %v458 = vunpack.c.l.b16 %v354
        %v459 = vunpack.c.l.b16 %v355
        %v460 = vunpack.c.l.b16 %v356
        %v461 = vunpack.c.l.b16 %v357
        %v462 = vunpack.c.l.b16 %v358
        %v463 = vunpack.c.l.b16 %v359
        %v464 = vunpack.c.l.b16 %v360
        %v465 = vpack.c.b16 %v434, %v433
        %v466 = vpack.c.b16 %v436, %v435
        %v467 = vpack.c.b16 %v438, %v437
        %v468 = vpack.c.b16 %v440, %v439
        %v469 = vpack.c.b16 %v442, %v441
        %v470 = vpack.c.b16 %v444, %v443
        %v471 = vpack.c.b16 %v446, %v445
        %v472 = vpack.c.b16 %v448, %v447
        %v473 = vpack.c.b16 %v450, %v449
        %v474 = vpack.c.b16 %v452, %v451
        %v475 = vpack.c.b16 %v454, %v453
        %v476 = vpack.c.b16 %v456, %v455
        %v477 = vpack.c.b16 %v458, %v457
        %v478 = vpack.c.b16 %v460, %v459
        %v479 = vpack.c.b16 %v462, %v461
        %v480 = vpack.c.b16 %v464, %v463
        %v493 = vunpack.c.l.b16 %v389
        %v494 = vunpack.c.l.b16 %v390
        %v495 = vunpack.c.l.b16 %v391
        %v496 = vunpack.c.l.b16 %v392
        %v497 = vunpack.c.l.b16 %v393
        %v498 = vunpack.c.l.b16 %v394
        %v499 = vunpack.c.l.b16 %v395
        %v500 = vunpack.c.l.b16 %v396
        %v501 = vunpack.c.l.b16 %v397
        %v502 = vunpack.c.l.b16 %v398
        %v503 = vunpack.c.l.b16 %v399
        %v504 = vunpack.c.l.b16 %v400
        %v505 = vpack.c.b16 %v494, %v493
        %v506 = vpack.c.b16 %v496, %v495
        %v507 = vpack.c.b16 %v498, %v497
        %v508 = vpack.c.b16 %v500, %v499
        %v509 = vpack.c.b16 %v502, %v501
        %v510 = vpack.c.b16 %v504, %v503
        %vm517 = vcmask 785408
        %v519 = vsel %vm517, %v465, 0
        %v522 = vsel %vm517, %v466, 0
        %v525 = vsel %vm517, %v467, 0
        %v528 = vsel %vm517, %v468, 0
        %v531 = vsel %vm517, %v469, 0
        %v534 = vsel %vm517, %v470, 0
        %v537 = vsel %vm517, %v471, 0
        %v540 = vsel %vm517, %v472, 0
        %v543 = vsel %vm517, %v473, 0
        %v546 = vsel %vm517, %v474, 0
        %v549 = vsel %vm517, %v475, 0
        %v552 = vsel %vm517, %v476, 0
        %v555 = vsel %vm517, %v477, 0
        %v558 = vsel %vm517, %v478, 0
        %v561 = vsel %vm517, %v479, 0
        %v564 = vsel %vm517, %v480, 0
        %566 = vmatpush.bf16.msra.mxu0 0
        %567 = vmatpush.bf16.msra.mxu0 0
        %568 = vmatpush.bf16.msra.mxu0 %v510
        %569 = vmatpush.bf16.msra.mxu0 %v509
        %570 = vmatpush.bf16.msra.mxu0 %v508
        %571 = vmatpush.bf16.msra.mxu0 %v507
        %572 = vmatpush.bf16.msra.mxu0 %v506
        %573 = vmatpush.bf16.msra.mxu0 %v505
        %574 = vmatmul.bf16.gmra.mxu0 %v519
        %v575 = vpop.f32.mrf.mxu0
        %v576 = vadd.f32 0.0, %v575
        %v577 = vpop.f32.mrf.mxu0
        %v578 = vadd.f32 0.0, %v577
        %579 = vmatmul.bf16.gmra.mxu0 %v522
        %v580 = vpop.f32.mrf.mxu0
        %v581 = vadd.f32 0.0, %v580
        %v582 = vpop.f32.mrf.mxu0
        %v583 = vadd.f32 0.0, %v582
        %584 = vmatmul.bf16.gmra.mxu0 %v525
        %v585 = vpop.f32.mrf.mxu0
        %v586 = vadd.f32 0.0, %v585
        %v587 = vpop.f32.mrf.mxu0
        %v588 = vadd.f32 0.0, %v587
        %589 = vmatmul.bf16.gmra.mxu0 %v528
        %v590 = vpop.f32.mrf.mxu0
        %v591 = vadd.f32 0.0, %v590
        %v592 = vpop.f32.mrf.mxu0
        %v593 = vadd.f32 0.0, %v592
        %594 = vmatmul.bf16.gmra.mxu0 %v531
        %v595 = vpop.f32.mrf.mxu0
        %v596 = vadd.f32 0.0, %v595
        %v597 = vpop.f32.mrf.mxu0
        %v598 = vadd.f32 0.0, %v597
        %599 = vmatmul.bf16.gmra.mxu0 %v534
        %v600 = vpop.f32.mrf.mxu0
        %v601 = vadd.f32 0.0, %v600
        %v602 = vpop.f32.mrf.mxu0
        %v603 = vadd.f32 0.0, %v602
        %604 = vmatmul.bf16.gmra.mxu0 %v537
        %v605 = vpop.f32.mrf.mxu0
        %v606 = vadd.f32 0.0, %v605
        %v607 = vpop.f32.mrf.mxu0
        %v608 = vadd.f32 0.0, %v607
        %609 = vmatmul.bf16.gmra.mxu0 %v540
        %v610 = vpop.f32.mrf.mxu0
        %v611 = vadd.f32 0.0, %v610
        %v612 = vpop.f32.mrf.mxu0
        %v613 = vadd.f32 0.0, %v612
        %614 = vmatmul.bf16.gmra.mxu0 %v543
        %v615 = vpop.f32.mrf.mxu0
        %v616 = vadd.f32 0.0, %v615
        %v617 = vpop.f32.mrf.mxu0
        %v618 = vadd.f32 0.0, %v617
        %619 = vmatmul.bf16.gmra.mxu0 %v546
        %v620 = vpop.f32.mrf.mxu0
        %v621 = vadd.f32 0.0, %v620
        %v622 = vpop.f32.mrf.mxu0
        %v623 = vadd.f32 0.0, %v622
        %624 = vmatmul.bf16.gmra.mxu0 %v549
        %v625 = vpop.f32.mrf.mxu0
        %v626 = vadd.f32 0.0, %v625
        %v627 = vpop.f32.mrf.mxu0
        %v628 = vadd.f32 0.0, %v627
        %629 = vmatmul.bf16.gmra.mxu0 %v552
        %v630 = vpop.f32.mrf.mxu0
        %v631 = vadd.f32 0.0, %v630
        %v632 = vpop.f32.mrf.mxu0
        %v633 = vadd.f32 0.0, %v632
        %634 = vmatmul.bf16.gmra.mxu0 %v555
        %v635 = vpop.f32.mrf.mxu0
        %v636 = vadd.f32 0.0, %v635
        %v637 = vpop.f32.mrf.mxu0
        %v638 = vadd.f32 0.0, %v637
        %639 = vmatmul.bf16.gmra.mxu0 %v558
        %v640 = vpop.f32.mrf.mxu0
        %v641 = vadd.f32 0.0, %v640
        %v642 = vpop.f32.mrf.mxu0
        %v643 = vadd.f32 0.0, %v642
        %644 = vmatmul.bf16.gmra.mxu0 %v561
        %v645 = vpop.f32.mrf.mxu0
        %v646 = vadd.f32 0.0, %v645
        %v647 = vpop.f32.mrf.mxu0
        %v648 = vadd.f32 0.0, %v647
        %649 = vmatmul.bf16.gmra.mxu0 %v564
        %v650 = vpop.f32.mrf.mxu0
        %v651 = vadd.f32 0.0, %v650
        %v652 = vpop.f32.mrf.mxu0
        %v653 = vadd.f32 0.0, %v652
        %654 = vdwg.mxu0
        %v655 = vld [vmem:[#allocation8] sm:$0xf]
        %v656 = vld [vmem:[#allocation8 + $0x4] sm:$0xf]
        %v657 = vld [vmem:[#allocation8 + $0x8] sm:$0xf]
        %v658 = vld [vmem:[#allocation8 + $0xc] sm:$0xf]
        %v659 = vld [vmem:[#allocation8 + $0x10] sm:$0xf]
        %v660 = vld [vmem:[#allocation8 + $0x14] sm:$0xf]
        %v661 = vld [vmem:[#allocation8 + $0x18] sm:$0xf]
        %v662 = vld [vmem:[#allocation8 + $0x1c] sm:$0xf]
        %v663 = vld [vmem:[#allocation8 + $0x20] sm:$0xf]
        %v664 = vld [vmem:[#allocation8 + $0x24] sm:$0xf]
        %v665 = vld [vmem:[#allocation8 + $0x28] sm:$0xf]
        %v666 = vld [vmem:[#allocation8 + $0x2c] sm:$0xf]
        %v671 = vunpack.c.l.b16 %v361
        %v672 = vunpack.c.l.b16 %v362
        %v673 = vunpack.c.l.b16 %v363
        %v674 = vunpack.c.l.b16 %v364
        %v675 = vpack.c.b16 %v672, %v671
        %v676 = vpack.c.b16 %v674, %v673
        %v689 = vunpack.c.l.b16 %v655
        %v690 = vunpack.c.l.b16 %v656
        %v691 = vunpack.c.l.b16 %v657
        %v692 = vunpack.c.l.b16 %v658
        %v693 = vunpack.c.l.b16 %v659
        %v694 = vunpack.c.l.b16 %v660
        %v695 = vunpack.c.l.b16 %v661
        %v696 = vunpack.c.l.b16 %v662
        %v697 = vunpack.c.l.b16 %v663
        %v698 = vunpack.c.l.b16 %v664
        %v699 = vunpack.c.l.b16 %v665
        %v700 = vunpack.c.l.b16 %v666
        %v701 = vpack.c.b16 %v690, %v689
        %v702 = vpack.c.b16 %v692, %v691
        %v703 = vpack.c.b16 %v694, %v693
        %v704 = vpack.c.b16 %v696, %v695
        %v705 = vpack.c.b16 %v698, %v697
        %v706 = vpack.c.b16 %v700, %v699
        %v714 = vsel %vm517, %v675, 0
        %v717 = vsel %vm517, %v676, 0
        %719 = vmatpush.bf16.msra.mxu0 0
        %720 = vmatpush.bf16.msra.mxu0 0
        %721 = vmatpush.bf16.msra.mxu0 %v706
        %722 = vmatpush.bf16.msra.mxu0 %v705
        %723 = vmatpush.bf16.msra.mxu0 %v704
        %724 = vmatpush.bf16.msra.mxu0 %v703
        %725 = vmatpush.bf16.msra.mxu0 %v702
        %726 = vmatpush.bf16.msra.mxu0 %v701
        %727 = vmatmul.bf16.gmra.mxu0 %v525
        %v728 = vpop.f32.mrf.mxu0
        %v729 = vadd.f32 0.0, %v728
        %v730 = vpop.f32.mrf.mxu0
        %v731 = vadd.f32 0.0, %v730
        %732 = vmatmul.bf16.gmra.mxu0 %v528
        %v733 = vpop.f32.mrf.mxu0
        %v734 = vadd.f32 0.0, %v733
        %v735 = vpop.f32.mrf.mxu0
        %v736 = vadd.f32 0.0, %v735
        %737 = vmatmul.bf16.gmra.mxu0 %v531
        %v738 = vpop.f32.mrf.mxu0
        %v739 = vadd.f32 0.0, %v738
        %v740 = vpop.f32.mrf.mxu0
        %v741 = vadd.f32 0.0, %v740
        %742 = vmatmul.bf16.gmra.mxu0 %v534
        %v743 = vpop.f32.mrf.mxu0
        %v744 = vadd.f32 0.0, %v743
        %v745 = vpop.f32.mrf.mxu0
        %v746 = vadd.f32 0.0, %v745
        %747 = vmatmul.bf16.gmra.mxu0 %v537
        %v748 = vpop.f32.mrf.mxu0
        %v749 = vadd.f32 0.0, %v748
        %v750 = vpop.f32.mrf.mxu0
        %v751 = vadd.f32 0.0, %v750
        %752 = vmatmul.bf16.gmra.mxu0 %v540
        %v753 = vpop.f32.mrf.mxu0
        %v754 = vadd.f32 0.0, %v753
        %v755 = vpop.f32.mrf.mxu0
        %v756 = vadd.f32 0.0, %v755
        %757 = vmatmul.bf16.gmra.mxu0 %v543
        %v758 = vpop.f32.mrf.mxu0
        %v759 = vadd.f32 0.0, %v758
        %v760 = vpop.f32.mrf.mxu0
        %v761 = vadd.f32 0.0, %v760
        %762 = vmatmul.bf16.gmra.mxu0 %v546
        %v763 = vpop.f32.mrf.mxu0
        %v764 = vadd.f32 0.0, %v763
        %v765 = vpop.f32.mrf.mxu0
        %v766 = vadd.f32 0.0, %v765
        %767 = vmatmul.bf16.gmra.mxu0 %v549
        %v768 = vpop.f32.mrf.mxu0
        %v769 = vadd.f32 0.0, %v768
        %v770 = vpop.f32.mrf.mxu0
        %v771 = vadd.f32 0.0, %v770
        %772 = vmatmul.bf16.gmra.mxu0 %v552
        %v773 = vpop.f32.mrf.mxu0
        %v774 = vadd.f32 0.0, %v773
        %v775 = vpop.f32.mrf.mxu0
        %v776 = vadd.f32 0.0, %v775
        %777 = vmatmul.bf16.gmra.mxu0 %v555
        %v778 = vpop.f32.mrf.mxu0
        %v779 = vadd.f32 0.0, %v778
        %v780 = vpop.f32.mrf.mxu0
        %v781 = vadd.f32 0.0, %v780
        %782 = vmatmul.bf16.gmra.mxu0 %v558
        %v783 = vpop.f32.mrf.mxu0
        %v784 = vadd.f32 0.0, %v783
        %v785 = vpop.f32.mrf.mxu0
        %v786 = vadd.f32 0.0, %v785
        %787 = vmatmul.bf16.gmra.mxu0 %v561
        %v788 = vpop.f32.mrf.mxu0
        %v789 = vadd.f32 0.0, %v788
        %v790 = vpop.f32.mrf.mxu0
        %v791 = vadd.f32 0.0, %v790
        %792 = vmatmul.bf16.gmra.mxu0 %v564
        %v793 = vpop.f32.mrf.mxu0
        %v794 = vadd.f32 0.0, %v793
        %v795 = vpop.f32.mrf.mxu0
        %v796 = vadd.f32 0.0, %v795
        %797 = vmatmul.bf16.gmra.mxu0 %v714
        %v798 = vpop.f32.mrf.mxu0
        %v799 = vadd.f32 0.0, %v798
        %v800 = vpop.f32.mrf.mxu0
        %v801 = vadd.f32 0.0, %v800
        %802 = vmatmul.bf16.gmra.mxu0 %v717
        %v803 = vpop.f32.mrf.mxu0
        %v804 = vadd.f32 0.0, %v803
        %v805 = vpop.f32.mrf.mxu0
        %v806 = vadd.f32 0.0, %v805
        %807 = vdwg.mxu0
        %v808 = vld [vmem:[#allocation10] sm:$0xf]
        %v810 = vperm.slane %v808, 0
        %v811 = vperm.slane %v808, 1
        %v812 = vperm.slane %v808, 2
        %v813 = vperm.slane %v808, 3
        %v842 = vunpack.c.l.b16 %v365
        %v843 = vunpack.c.h.b16 %v365
        %v844 = vunpack.c.l.b16 %v366
        %v845 = vunpack.c.h.b16 %v366
        %v846 = vunpack.c.l.b16 %v367
        %v847 = vunpack.c.h.b16 %v367
        %v848 = vunpack.c.l.b16 %v368
        %v849 = vunpack.c.h.b16 %v368
        %v850 = vunpack.c.l.b16 %v369
        %v851 = vunpack.c.h.b16 %v369
        %v852 = vunpack.c.l.b16 %v370
        %v853 = vunpack.c.h.b16 %v370
        %v854 = vunpack.c.l.b16 %v371
        %v855 = vunpack.c.h.b16 %v371
        %v856 = vunpack.c.l.b16 %v372
        %v857 = vunpack.c.h.b16 %v372
        %v858 = vunpack.c.l.b16 %v373
        %v859 = vunpack.c.h.b16 %v373
        %v860 = vunpack.c.l.b16 %v374
        %v861 = vunpack.c.h.b16 %v374
        %v862 = vunpack.c.l.b16 %v375
        %v863 = vunpack.c.h.b16 %v375
        %v864 = vunpack.c.l.b16 %v376
        %v865 = vunpack.c.h.b16 %v376
        %v866 = vunpack.c.l.b16 %v377
        %v867 = vunpack.c.h.b16 %v377
        %v868 = vunpack.c.l.b16 %v378
        %v869 = vunpack.c.h.b16 %v378
        %v870 = vunpack.c.l.b16 %v379
        %v871 = vunpack.c.h.b16 %v379
        %v872 = vunpack.c.l.b16 %v380
        %v873 = vunpack.c.h.b16 %v380
        %v874 = vunpack.c.l.b16 %v381
        %v875 = vunpack.c.h.b16 %v381
        %v876 = vunpack.c.l.b16 %v382
        %v877 = vunpack.c.h.b16 %v382
        %v878 = vunpack.c.l.b16 %v383
        %v879 = vunpack.c.h.b16 %v383
        %v880 = vunpack.c.l.b16 %v384
        %v881 = vunpack.c.h.b16 %v384
        %v882 = vunpack.c.l.b16 %v385
        %v883 = vunpack.c.h.b16 %v385
        %v884 = vunpack.c.l.b16 %v386
        %v885 = vunpack.c.h.b16 %v386
        %v886 = vunpack.c.l.b16 %v387
        %v887 = vunpack.c.h.b16 %v387
        %v888 = vunpack.c.l.b16 %v388
        %v889 = vunpack.c.h.b16 %v388
        %v890 = vpack.c.b16 %v846, %v842
        %v891 = vpack.c.b16 %v847, %v843
        %v892 = vpack.c.b16 %v848, %v844
        %v893 = vpack.c.b16 %v849, %v845
        %v894 = vpack.c.b16 %v854, %v850
        %v895 = vpack.c.b16 %v855, %v851
        %v896 = vpack.c.b16 %v856, %v852
        %v897 = vpack.c.b16 %v857, %v853
        %v898 = vpack.c.b16 %v862, %v858
        %v899 = vpack.c.b16 %v863, %v859
        %v900 = vpack.c.b16 %v864, %v860
        %v901 = vpack.c.b16 %v865, %v861
        %v902 = vpack.c.b16 %v870, %v866
        %v903 = vpack.c.b16 %v871, %v867
        %v904 = vpack.c.b16 %v872, %v868
        %v905 = vpack.c.b16 %v873, %v869
        %v906 = vpack.c.b16 %v878, %v874
        %v907 = vpack.c.b16 %v879, %v875
        %v908 = vpack.c.b16 %v880, %v876
        %v909 = vpack.c.b16 %v881, %v877
        %v910 = vpack.c.b16 %v886, %v882
        %v911 = vpack.c.b16 %v887, %v883
        %v912 = vpack.c.b16 %v888, %v884
        %v913 = vpack.c.b16 %v889, %v885
        %938 = vmatpush.bf16.msra.mxu0 0
        %939 = vmatpush.bf16.msra.mxu0 0
        %940 = vmatpush.bf16.msra.mxu0 %v910
        %941 = vmatpush.bf16.msra.mxu0 %v906
        %942 = vmatpush.bf16.msra.mxu0 %v902
        %943 = vmatpush.bf16.msra.mxu0 %v898
        %944 = vmatpush.bf16.msra.mxu0 %v894
        %945 = vmatpush.bf16.msra.mxu0 %v890
        %946 = vmatmul.bf16.gmra.mxu0 %v522
        %v947 = vpop.f32.mrf.mxu0
        %v948 = vadd.f32 %v810, %v947
        %v949 = vpop.f32.mrf.mxu0
        %v950 = vadd.f32 %v810, %v949
        %951 = vmatmul.bf16.gmra.mxu0 %v525
        %v952 = vpop.f32.mrf.mxu0
        %v953 = vadd.f32 %v810, %v952
        %v954 = vpop.f32.mrf.mxu0
        %v955 = vadd.f32 %v810, %v954
        %956 = vmatmul.bf16.gmra.mxu0 %v528
        %v957 = vpop.f32.mrf.mxu0
        %v958 = vadd.f32 %v810, %v957
        %v959 = vpop.f32.mrf.mxu0
        %v960 = vadd.f32 %v810, %v959
        %961 = vmatmul.bf16.gmra.mxu0 %v531
        %v962 = vpop.f32.mrf.mxu0
        %v963 = vadd.f32 %v810, %v962
        %v964 = vpop.f32.mrf.mxu0
        %v965 = vadd.f32 %v810, %v964
        %966 = vmatmul.bf16.gmra.mxu0 %v534
        %v967 = vpop.f32.mrf.mxu0
        %v968 = vadd.f32 %v810, %v967
        %v969 = vpop.f32.mrf.mxu0
        %v970 = vadd.f32 %v810, %v969
        %971 = vmatmul.bf16.gmra.mxu0 %v537
        %v972 = vpop.f32.mrf.mxu0
        %v973 = vadd.f32 %v810, %v972
        %v974 = vpop.f32.mrf.mxu0
        %v975 = vadd.f32 %v810, %v974
        %976 = vmatmul.bf16.gmra.mxu0 %v540
        %v977 = vpop.f32.mrf.mxu0
        %v978 = vadd.f32 %v810, %v977
        %v979 = vpop.f32.mrf.mxu0
        %v980 = vadd.f32 %v810, %v979
        %981 = vmatmul.bf16.gmra.mxu0 %v543
        %v982 = vpop.f32.mrf.mxu0
        %v983 = vadd.f32 %v810, %v982
        %v984 = vpop.f32.mrf.mxu0
        %v985 = vadd.f32 %v810, %v984
        %986 = vmatmul.bf16.gmra.mxu0 %v546
        %v987 = vpop.f32.mrf.mxu0
        %v988 = vadd.f32 %v810, %v987
        %v989 = vpop.f32.mrf.mxu0
        %v990 = vadd.f32 %v810, %v989
        %991 = vmatmul.bf16.gmra.mxu0 %v549
        %v992 = vpop.f32.mrf.mxu0
        %v993 = vadd.f32 %v810, %v992
        %v994 = vpop.f32.mrf.mxu0
        %v995 = vadd.f32 %v810, %v994
        %996 = vmatmul.bf16.gmra.mxu0 %v552
        %v997 = vpop.f32.mrf.mxu0
        %v998 = vadd.f32 %v810, %v997
        %v999 = vpop.f32.mrf.mxu0
        %v1000 = vadd.f32 %v810, %v999
        %1001 = vmatmul.bf16.gmra.mxu0 %v555
        %v1002 = vpop.f32.mrf.mxu0
        %v1003 = vadd.f32 %v810, %v1002
        %v1004 = vpop.f32.mrf.mxu0
        %v1005 = vadd.f32 %v810, %v1004
        %1006 = vmatmul.bf16.gmra.mxu0 %v558
        %v1007 = vpop.f32.mrf.mxu0
        %v1008 = vadd.f32 %v810, %v1007
        %v1009 = vpop.f32.mrf.mxu0
        %v1010 = vadd.f32 %v810, %v1009
        %1011 = vmatmul.bf16.gmra.mxu0 %v561
        %v1012 = vpop.f32.mrf.mxu0
        %v1013 = vadd.f32 %v810, %v1012
        %v1014 = vpop.f32.mrf.mxu0
        %v1015 = vadd.f32 %v810, %v1014
        %1016 = vmatmul.bf16.gmra.mxu0 %v564
        %v1017 = vpop.f32.mrf.mxu0
        %v1018 = vadd.f32 %v810, %v1017
        %v1019 = vpop.f32.mrf.mxu0
        %v1020 = vadd.f32 %v810, %v1019
        %1021 = vmatmul.bf16.gmra.mxu0 %v714
        %v1022 = vpop.f32.mrf.mxu0
        %v1023 = vadd.f32 %v810, %v1022
        %v1024 = vpop.f32.mrf.mxu0
        %v1025 = vadd.f32 %v810, %v1024
        %1026 = vdwg.mxu0
        %1027 = vmatpush.bf16.msra.mxu0 0
        %1028 = vmatpush.bf16.msra.mxu0 0
        %1029 = vmatpush.bf16.msra.mxu0 %v911
        %1030 = vmatpush.bf16.msra.mxu0 %v907
        %1031 = vmatpush.bf16.msra.mxu0 %v903
        %1032 = vmatpush.bf16.msra.mxu0 %v899
        %1033 = vmatpush.bf16.msra.mxu0 %v895
        %1034 = vmatpush.bf16.msra.mxu0 %v891
        %1035 = vmatmul.bf16.gmra.mxu0 %v522
        %v1036 = vpop.f32.mrf.mxu0
        %v1037 = vadd.f32 %v811, %v1036
        %v1038 = vpop.f32.mrf.mxu0
        %v1039 = vadd.f32 %v811, %v1038
        %1040 = vmatmul.bf16.gmra.mxu0 %v525
        %v1041 = vpop.f32.mrf.mxu0
        %v1042 = vadd.f32 %v811, %v1041
        %v1043 = vpop.f32.mrf.mxu0
        %v1044 = vadd.f32 %v811, %v1043
        %1045 = vmatmul.bf16.gmra.mxu0 %v528
        %v1046 = vpop.f32.mrf.mxu0
        %v1047 = vadd.f32 %v811, %v1046
        %v1048 = vpop.f32.mrf.mxu0
        %v1049 = vadd.f32 %v811, %v1048
        %1050 = vmatmul.bf16.gmra.mxu0 %v531
        %v1051 = vpop.f32.mrf.mxu0
        %v1052 = vadd.f32 %v811, %v1051
        %v1053 = vpop.f32.mrf.mxu0
        %v1054 = vadd.f32 %v811, %v1053
        %1055 = vmatmul.bf16.gmra.mxu0 %v534
        %v1056 = vpop.f32.mrf.mxu0
        %v1057 = vadd.f32 %v811, %v1056
        %v1058 = vpop.f32.mrf.mxu0
        %v1059 = vadd.f32 %v811, %v1058
        %1060 = vmatmul.bf16.gmra.mxu0 %v537
        %v1061 = vpop.f32.mrf.mxu0
        %v1062 = vadd.f32 %v811, %v1061
        %v1063 = vpop.f32.mrf.mxu0
        %v1064 = vadd.f32 %v811, %v1063
        %1065 = vmatmul.bf16.gmra.mxu0 %v540
        %v1066 = vpop.f32.mrf.mxu0
        %v1067 = vadd.f32 %v811, %v1066
        %v1068 = vpop.f32.mrf.mxu0
        %v1069 = vadd.f32 %v811, %v1068
        %1070 = vmatmul.bf16.gmra.mxu0 %v543
        %v1071 = vpop.f32.mrf.mxu0
        %v1072 = vadd.f32 %v811, %v1071
        %v1073 = vpop.f32.mrf.mxu0
        %v1074 = vadd.f32 %v811, %v1073
        %1075 = vmatmul.bf16.gmra.mxu0 %v546
        %v1076 = vpop.f32.mrf.mxu0
        %v1077 = vadd.f32 %v811, %v1076
        %v1078 = vpop.f32.mrf.mxu0
        %v1079 = vadd.f32 %v811, %v1078
        %1080 = vmatmul.bf16.gmra.mxu0 %v549
        %v1081 = vpop.f32.mrf.mxu0
        %v1082 = vadd.f32 %v811, %v1081
        %v1083 = vpop.f32.mrf.mxu0
        %v1084 = vadd.f32 %v811, %v1083
        %1085 = vmatmul.bf16.gmra.mxu0 %v552
        %v1086 = vpop.f32.mrf.mxu0
        %v1087 = vadd.f32 %v811, %v1086
        %v1088 = vpop.f32.mrf.mxu0
        %v1089 = vadd.f32 %v811, %v1088
        %1090 = vmatmul.bf16.gmra.mxu0 %v555
        %v1091 = vpop.f32.mrf.mxu0
        %v1092 = vadd.f32 %v811, %v1091
        %v1093 = vpop.f32.mrf.mxu0
        %v1094 = vadd.f32 %v811, %v1093
        %1095 = vmatmul.bf16.gmra.mxu0 %v558
        %v1096 = vpop.f32.mrf.mxu0
        %v1097 = vadd.f32 %v811, %v1096
        %v1098 = vpop.f32.mrf.mxu0
        %v1099 = vadd.f32 %v811, %v1098
        %1100 = vmatmul.bf16.gmra.mxu0 %v561
        %v1101 = vpop.f32.mrf.mxu0
        %v1102 = vadd.f32 %v811, %v1101
        %v1103 = vpop.f32.mrf.mxu0
        %v1104 = vadd.f32 %v811, %v1103
        %1105 = vmatmul.bf16.gmra.mxu0 %v564
        %v1106 = vpop.f32.mrf.mxu0
        %v1107 = vadd.f32 %v811, %v1106
        %v1108 = vpop.f32.mrf.mxu0
        %v1109 = vadd.f32 %v811, %v1108
        %1110 = vmatmul.bf16.gmra.mxu0 %v714
        %v1111 = vpop.f32.mrf.mxu0
        %v1112 = vadd.f32 %v811, %v1111
        %v1113 = vpop.f32.mrf.mxu0
        %v1114 = vadd.f32 %v811, %v1113
        %1115 = vdwg.mxu0
        %1116 = vmatpush.bf16.msra.mxu0 0
        %1117 = vmatpush.bf16.msra.mxu0 0
        %1118 = vmatpush.bf16.msra.mxu0 %v912
        %1119 = vmatpush.bf16.msra.mxu0 %v908
        %1120 = vmatpush.bf16.msra.mxu0 %v904
        %1121 = vmatpush.bf16.msra.mxu0 %v900
        %1122 = vmatpush.bf16.msra.mxu0 %v896
        %1123 = vmatpush.bf16.msra.mxu0 %v892
        %1124 = vmatmul.bf16.gmra.mxu0 %v522
        %v1125 = vpop.f32.mrf.mxu0
        %v1126 = vadd.f32 %v812, %v1125
        %v1127 = vpop.f32.mrf.mxu0
        %v1128 = vadd.f32 %v812, %v1127
        %1129 = vmatmul.bf16.gmra.mxu0 %v525
        %v1130 = vpop.f32.mrf.mxu0
        %v1131 = vadd.f32 %v812, %v1130
        %v1132 = vpop.f32.mrf.mxu0
        %v1133 = vadd.f32 %v812, %v1132
        %1134 = vmatmul.bf16.gmra.mxu0 %v528
        %v1135 = vpop.f32.mrf.mxu0
        %v1136 = vadd.f32 %v812, %v1135
        %v1137 = vpop.f32.mrf.mxu0
        %v1138 = vadd.f32 %v812, %v1137
        %1139 = vmatmul.bf16.gmra.mxu0 %v531
        %v1140 = vpop.f32.mrf.mxu0
        %v1141 = vadd.f32 %v812, %v1140
        %v1142 = vpop.f32.mrf.mxu0
        %v1143 = vadd.f32 %v812, %v1142
        %1144 = vmatmul.bf16.gmra.mxu0 %v534
        %v1145 = vpop.f32.mrf.mxu0
        %v1146 = vadd.f32 %v812, %v1145
        %v1147 = vpop.f32.mrf.mxu0
        %v1148 = vadd.f32 %v812, %v1147
        %1149 = vmatmul.bf16.gmra.mxu0 %v537
        %v1150 = vpop.f32.mrf.mxu0
        %v1151 = vadd.f32 %v812, %v1150
        %v1152 = vpop.f32.mrf.mxu0
        %v1153 = vadd.f32 %v812, %v1152
        %1154 = vmatmul.bf16.gmra.mxu0 %v540
        %v1155 = vpop.f32.mrf.mxu0
        %v1156 = vadd.f32 %v812, %v1155
        %v1157 = vpop.f32.mrf.mxu0
        %v1158 = vadd.f32 %v812, %v1157
        %1159 = vmatmul.bf16.gmra.mxu0 %v543
        %v1160 = vpop.f32.mrf.mxu0
        %v1161 = vadd.f32 %v812, %v1160
        %v1162 = vpop.f32.mrf.mxu0
        %v1163 = vadd.f32 %v812, %v1162
        %1164 = vmatmul.bf16.gmra.mxu0 %v546
        %v1165 = vpop.f32.mrf.mxu0
        %v1166 = vadd.f32 %v812, %v1165
        %v1167 = vpop.f32.mrf.mxu0
        %v1168 = vadd.f32 %v812, %v1167
        %1169 = vmatmul.bf16.gmra.mxu0 %v549
        %v1170 = vpop.f32.mrf.mxu0
        %v1171 = vadd.f32 %v812, %v1170
        %v1172 = vpop.f32.mrf.mxu0
        %v1173 = vadd.f32 %v812, %v1172
        %1174 = vmatmul.bf16.gmra.mxu0 %v552
        %v1175 = vpop.f32.mrf.mxu0
        %v1176 = vadd.f32 %v812, %v1175
        %v1177 = vpop.f32.mrf.mxu0
        %v1178 = vadd.f32 %v812, %v1177
        %1179 = vmatmul.bf16.gmra.mxu0 %v555
        %v1180 = vpop.f32.mrf.mxu0
        %v1181 = vadd.f32 %v812, %v1180
        %v1182 = vpop.f32.mrf.mxu0
        %v1183 = vadd.f32 %v812, %v1182
        %1184 = vmatmul.bf16.gmra.mxu0 %v558
        %v1185 = vpop.f32.mrf.mxu0
        %v1186 = vadd.f32 %v812, %v1185
        %v1187 = vpop.f32.mrf.mxu0
        %v1188 = vadd.f32 %v812, %v1187
        %1189 = vmatmul.bf16.gmra.mxu0 %v561
        %v1190 = vpop.f32.mrf.mxu0
        %v1191 = vadd.f32 %v812, %v1190
        %v1192 = vpop.f32.mrf.mxu0
        %v1193 = vadd.f32 %v812, %v1192
        %1194 = vmatmul.bf16.gmra.mxu0 %v564
        %v1195 = vpop.f32.mrf.mxu0
        %v1196 = vadd.f32 %v812, %v1195
        %v1197 = vpop.f32.mrf.mxu0
        %v1198 = vadd.f32 %v812, %v1197
        %1199 = vmatmul.bf16.gmra.mxu0 %v714
        %v1200 = vpop.f32.mrf.mxu0
        %v1201 = vadd.f32 %v812, %v1200
        %v1202 = vpop.f32.mrf.mxu0
        %v1203 = vadd.f32 %v812, %v1202
        %1204 = vdwg.mxu0
        %1205 = vmatpush.bf16.msra.mxu0 0
        %1206 = vmatpush.bf16.msra.mxu0 0
        %1207 = vmatpush.bf16.msra.mxu0 %v913
        %1208 = vmatpush.bf16.msra.mxu0 %v909
        %1209 = vmatpush.bf16.msra.mxu0 %v905
        %1210 = vmatpush.bf16.msra.mxu0 %v901
        %1211 = vmatpush.bf16.msra.mxu0 %v897
        %1212 = vmatpush.bf16.msra.mxu0 %v893
        %1213 = vmatmul.bf16.gmra.mxu0 %v522
        %v1214 = vpop.f32.mrf.mxu0
        %v1215 = vadd.f32 %v813, %v1214
        %v1216 = vpop.f32.mrf.mxu0
        %v1217 = vadd.f32 %v813, %v1216
        %1218 = vmatmul.bf16.gmra.mxu0 %v525
        %v1219 = vpop.f32.mrf.mxu0
        %v1220 = vadd.f32 %v813, %v1219
        %v1221 = vpop.f32.mrf.mxu0
        %v1222 = vadd.f32 %v813, %v1221
        %1223 = vmatmul.bf16.gmra.mxu0 %v528
        %v1224 = vpop.f32.mrf.mxu0
        %v1225 = vadd.f32 %v813, %v1224
        %v1226 = vpop.f32.mrf.mxu0
        %v1227 = vadd.f32 %v813, %v1226
        %1228 = vmatmul.bf16.gmra.mxu0 %v531
        %v1229 = vpop.f32.mrf.mxu0
        %v1230 = vadd.f32 %v813, %v1229
        %v1231 = vpop.f32.mrf.mxu0
        %v1232 = vadd.f32 %v813, %v1231
        %1233 = vmatmul.bf16.gmra.mxu0 %v534
        %v1234 = vpop.f32.mrf.mxu0
        %v1235 = vadd.f32 %v813, %v1234
        %v1236 = vpop.f32.mrf.mxu0
        %v1237 = vadd.f32 %v813, %v1236
        %1238 = vmatmul.bf16.gmra.mxu0 %v537
        %v1239 = vpop.f32.mrf.mxu0
        %v1240 = vadd.f32 %v813, %v1239
        %v1241 = vpop.f32.mrf.mxu0
        %v1242 = vadd.f32 %v813, %v1241
        %1243 = vmatmul.bf16.gmra.mxu0 %v540
        %v1244 = vpop.f32.mrf.mxu0
        %v1245 = vadd.f32 %v813, %v1244
        %v1246 = vpop.f32.mrf.mxu0
        %v1247 = vadd.f32 %v813, %v1246
        %1248 = vmatmul.bf16.gmra.mxu0 %v543
        %v1249 = vpop.f32.mrf.mxu0
        %v1250 = vadd.f32 %v813, %v1249
        %v1251 = vpop.f32.mrf.mxu0
        %v1252 = vadd.f32 %v813, %v1251
        %1253 = vmatmul.bf16.gmra.mxu0 %v546
        %v1254 = vpop.f32.mrf.mxu0
        %v1255 = vadd.f32 %v813, %v1254
        %v1256 = vpop.f32.mrf.mxu0
        %v1257 = vadd.f32 %v813, %v1256
        %1258 = vmatmul.bf16.gmra.mxu0 %v549
        %v1259 = vpop.f32.mrf.mxu0
        %v1260 = vadd.f32 %v813, %v1259
        %v1261 = vpop.f32.mrf.mxu0
        %v1262 = vadd.f32 %v813, %v1261
        %1263 = vmatmul.bf16.gmra.mxu0 %v552
        %v1264 = vpop.f32.mrf.mxu0
        %v1265 = vadd.f32 %v813, %v1264
        %v1266 = vpop.f32.mrf.mxu0
        %v1267 = vadd.f32 %v813, %v1266
        %1268 = vmatmul.bf16.gmra.mxu0 %v555
        %v1269 = vpop.f32.mrf.mxu0
        %v1270 = vadd.f32 %v813, %v1269
        %v1271 = vpop.f32.mrf.mxu0
        %v1272 = vadd.f32 %v813, %v1271
        %1273 = vmatmul.bf16.gmra.mxu0 %v558
        %v1274 = vpop.f32.mrf.mxu0
        %v1275 = vadd.f32 %v813, %v1274
        %v1276 = vpop.f32.mrf.mxu0
        %v1277 = vadd.f32 %v813, %v1276
        %1278 = vmatmul.bf16.gmra.mxu0 %v561
        %v1279 = vpop.f32.mrf.mxu0
        %v1280 = vadd.f32 %v813, %v1279
        %v1281 = vpop.f32.mrf.mxu0
        %v1282 = vadd.f32 %v813, %v1281
        %1283 = vmatmul.bf16.gmra.mxu0 %v564
        %v1284 = vpop.f32.mrf.mxu0
        %v1285 = vadd.f32 %v813, %v1284
        %v1286 = vpop.f32.mrf.mxu0
        %v1287 = vadd.f32 %v813, %v1286
        %1288 = vmatmul.bf16.gmra.mxu0 %v714
        %v1289 = vpop.f32.mrf.mxu0
        %v1290 = vadd.f32 %v813, %v1289
        %v1291 = vpop.f32.mrf.mxu0
        %v1292 = vadd.f32 %v813, %v1291
        %1293 = vdwg.mxu0
        %v1294 = vadd.f32 %v948, %v576
        %v1295 = vadd.f32 %v950, %v578
        %v1296 = vadd.f32 %v953, %v581
        %v1297 = vadd.f32 %v955, %v583
        %v1298 = vadd.f32 %v958, %v586
        %v1299 = vadd.f32 %v960, %v588
        %v1300 = vadd.f32 %v963, %v591
        %v1301 = vadd.f32 %v965, %v593
        %v1302 = vadd.f32 %v968, %v596
        %v1303 = vadd.f32 %v970, %v598
        %v1304 = vadd.f32 %v973, %v601
        %v1305 = vadd.f32 %v975, %v603
        %v1306 = vadd.f32 %v978, %v606
        %v1307 = vadd.f32 %v980, %v608
        %v1308 = vadd.f32 %v983, %v611
        %v1309 = vadd.f32 %v985, %v613
        %v1310 = vadd.f32 %v988, %v616
        %v1311 = vadd.f32 %v990, %v618
        %v1312 = vadd.f32 %v993, %v621
        %v1313 = vadd.f32 %v995, %v623
        %v1314 = vadd.f32 %v998, %v626
        %v1315 = vadd.f32 %v1000, %v628
        %v1316 = vadd.f32 %v1003, %v631
        %v1317 = vadd.f32 %v1005, %v633
        %v1318 = vadd.f32 %v1008, %v636
        %v1319 = vadd.f32 %v1010, %v638
        %v1320 = vadd.f32 %v1013, %v641
        %v1321 = vadd.f32 %v1015, %v643
        %v1322 = vadd.f32 %v1018, %v646
        %v1323 = vadd.f32 %v1020, %v648
        %v1324 = vadd.f32 %v1023, %v651
        %v1325 = vadd.f32 %v1025, %v653
        %1326 = vst [vmem:[%s326] sm:$0xff] %v1294
        %1327 = vst [vmem:[%s326 + $0x8] sm:$0xff] %v1295
        %1328 = vst [vmem:[%s326 + $0x40] sm:$0xff] %v1296
        %1329 = vst [vmem:[%s326 + $0x48] sm:$0xff] %v1297
        %1330 = vst [vmem:[%s326 + $0x80] sm:$0xff] %v1298
        %1331 = vst [vmem:[%s326 + $0x88] sm:$0xff] %v1299
        %1332 = vst [vmem:[%s326 + $0xc0] sm:$0xff] %v1300
        %1333 = vst [vmem:[%s326 + $0xc8] sm:$0xff] %v1301
        %1334 = vst [vmem:[%s326 + $0x100] sm:$0xff] %v1302
        %1335 = vst [vmem:[%s326 + $0x108] sm:$0xff] %v1303
        %1336 = vst [vmem:[%s326 + $0x140] sm:$0xff] %v1304
        %1337 = vst [vmem:[%s326 + $0x148] sm:$0xff] %v1305
        %1338 = vst [vmem:[%s326 + $0x180] sm:$0xff] %v1306
        %1339 = vst [vmem:[%s326 + $0x188] sm:$0xff] %v1307
        %1340 = vst [vmem:[%s326 + $0x1c0] sm:$0xff] %v1308
        %1341 = vst [vmem:[%s326 + $0x1c8] sm:$0xff] %v1309
        %1342 = vst [vmem:[%s326 + $0x200] sm:$0xff] %v1310
        %1343 = vst [vmem:[%s326 + $0x208] sm:$0xff] %v1311
        %1344 = vst [vmem:[%s326 + $0x240] sm:$0xff] %v1312
        %1345 = vst [vmem:[%s326 + $0x248] sm:$0xff] %v1313
        %1346 = vst [vmem:[%s326 + $0x280] sm:$0xff] %v1314
        %1347 = vst [vmem:[%s326 + $0x288] sm:$0xff] %v1315
        %1348 = vst [vmem:[%s326 + $0x2c0] sm:$0xff] %v1316
        %1349 = vst [vmem:[%s326 + $0x2c8] sm:$0xff] %v1317
        %1350 = vst [vmem:[%s326 + $0x300] sm:$0xff] %v1318
        %1351 = vst [vmem:[%s326 + $0x308] sm:$0xff] %v1319
        %1352 = vst [vmem:[%s326 + $0x340] sm:$0xff] %v1320
        %1353 = vst [vmem:[%s326 + $0x348] sm:$0xff] %v1321
        %1354 = vst [vmem:[%s326 + $0x380] sm:$0xff] %v1322
        %1355 = vst [vmem:[%s326 + $0x388] sm:$0xff] %v1323
        %1356 = vst [vmem:[%s326 + $0x3c0] sm:$0xff] %v1324
        %1357 = vst [vmem:[%s326 + $0x3c8] sm:$0xff] %v1325
        %s1358 = scalar_lea.vmem %s326, 16 [#allocation11]
        %1359 = vst [vmem:[%s1358] sm:$0xff] %v1037
        %1360 = vst [vmem:[%s1358 + $0x8] sm:$0xff] %v1039
        %1361 = vst [vmem:[%s1358 + $0x40] sm:$0xff] %v1042
        %1362 = vst [vmem:[%s1358 + $0x48] sm:$0xff] %v1044
        %1363 = vst [vmem:[%s1358 + $0x80] sm:$0xff] %v1047
        %1364 = vst [vmem:[%s1358 + $0x88] sm:$0xff] %v1049
        %1365 = vst [vmem:[%s1358 + $0xc0] sm:$0xff] %v1052
        %1366 = vst [vmem:[%s1358 + $0xc8] sm:$0xff] %v1054
        %1367 = vst [vmem:[%s1358 + $0x100] sm:$0xff] %v1057
        %1368 = vst [vmem:[%s1358 + $0x108] sm:$0xff] %v1059
        %1369 = vst [vmem:[%s1358 + $0x140] sm:$0xff] %v1062
        %1370 = vst [vmem:[%s1358 + $0x148] sm:$0xff] %v1064
        %1371 = vst [vmem:[%s1358 + $0x180] sm:$0xff] %v1067
        %1372 = vst [vmem:[%s1358 + $0x188] sm:$0xff] %v1069
        %1373 = vst [vmem:[%s1358 + $0x1c0] sm:$0xff] %v1072
        %1374 = vst [vmem:[%s1358 + $0x1c8] sm:$0xff] %v1074
        %1375 = vst [vmem:[%s1358 + $0x200] sm:$0xff] %v1077
        %1376 = vst [vmem:[%s1358 + $0x208] sm:$0xff] %v1079
        %1377 = vst [vmem:[%s1358 + $0x240] sm:$0xff] %v1082
        %1378 = vst [vmem:[%s1358 + $0x248] sm:$0xff] %v1084
        %1379 = vst [vmem:[%s1358 + $0x280] sm:$0xff] %v1087
        %1380 = vst [vmem:[%s1358 + $0x288] sm:$0xff] %v1089
        %1381 = vst [vmem:[%s1358 + $0x2c0] sm:$0xff] %v1092
        %1382 = vst [vmem:[%s1358 + $0x2c8] sm:$0xff] %v1094
        %1383 = vst [vmem:[%s1358 + $0x300] sm:$0xff] %v1097
        %1384 = vst [vmem:[%s1358 + $0x308] sm:$0xff] %v1099
        %1385 = vst [vmem:[%s1358 + $0x340] sm:$0xff] %v1102
        %1386 = vst [vmem:[%s1358 + $0x348] sm:$0xff] %v1104
        %1387 = vst [vmem:[%s1358 + $0x380] sm:$0xff] %v1107
        %1388 = vst [vmem:[%s1358 + $0x388] sm:$0xff] %v1109
        %1389 = vst [vmem:[%s1358 + $0x3c0] sm:$0xff] %v1112
        %1390 = vst [vmem:[%s1358 + $0x3c8] sm:$0xff] %v1114
        %s1391 = scalar_lea.vmem %s326, 32 [#allocation11]
        %1392 = vst [vmem:[%s1391] sm:$0xff] %v1126
        %1393 = vst [vmem:[%s1391 + $0x8] sm:$0xff] %v1128
        %1394 = vst [vmem:[%s1391 + $0x40] sm:$0xff] %v1131
        %1395 = vst [vmem:[%s1391 + $0x48] sm:$0xff] %v1133
        %1396 = vst [vmem:[%s1391 + $0x80] sm:$0xff] %v1136
        %1397 = vst [vmem:[%s1391 + $0x88] sm:$0xff] %v1138
        %1398 = vst [vmem:[%s1391 + $0xc0] sm:$0xff] %v1141
        %1399 = vst [vmem:[%s1391 + $0xc8] sm:$0xff] %v1143
        %1400 = vst [vmem:[%s1391 + $0x100] sm:$0xff] %v1146
        %1401 = vst [vmem:[%s1391 + $0x108] sm:$0xff] %v1148
        %1402 = vst [vmem:[%s1391 + $0x140] sm:$0xff] %v1151
        %1403 = vst [vmem:[%s1391 + $0x148] sm:$0xff] %v1153
        %1404 = vst [vmem:[%s1391 + $0x180] sm:$0xff] %v1156
        %1405 = vst [vmem:[%s1391 + $0x188] sm:$0xff] %v1158
        %1406 = vst [vmem:[%s1391 + $0x1c0] sm:$0xff] %v1161
        %1407 = vst [vmem:[%s1391 + $0x1c8] sm:$0xff] %v1163
        %1408 = vst [vmem:[%s1391 + $0x200] sm:$0xff] %v1166
        %1409 = vst [vmem:[%s1391 + $0x208] sm:$0xff] %v1168
        %1410 = vst [vmem:[%s1391 + $0x240] sm:$0xff] %v1171
        %1411 = vst [vmem:[%s1391 + $0x248] sm:$0xff] %v1173
        %1412 = vst [vmem:[%s1391 + $0x280] sm:$0xff] %v1176
        %1413 = vst [vmem:[%s1391 + $0x288] sm:$0xff] %v1178
        %1414 = vst [vmem:[%s1391 + $0x2c0] sm:$0xff] %v1181
        %1415 = vst [vmem:[%s1391 + $0x2c8] sm:$0xff] %v1183
        %1416 = vst [vmem:[%s1391 + $0x300] sm:$0xff] %v1186
        %1417 = vst [vmem:[%s1391 + $0x308] sm:$0xff] %v1188
        %1418 = vst [vmem:[%s1391 + $0x340] sm:$0xff] %v1191
        %1419 = vst [vmem:[%s1391 + $0x348] sm:$0xff] %v1193
        %1420 = vst [vmem:[%s1391 + $0x380] sm:$0xff] %v1196
        %1421 = vst [vmem:[%s1391 + $0x388] sm:$0xff] %v1198
        %1422 = vst [vmem:[%s1391 + $0x3c0] sm:$0xff] %v1201
        %1423 = vst [vmem:[%s1391 + $0x3c8] sm:$0xff] %v1203
        %v1424 = vadd.f32 %v1215, %v729
        %v1425 = vadd.f32 %v1217, %v731
        %v1426 = vadd.f32 %v1220, %v734
        %v1427 = vadd.f32 %v1222, %v736
        %v1428 = vadd.f32 %v1225, %v739
        %v1429 = vadd.f32 %v1227, %v741
        %v1430 = vadd.f32 %v1230, %v744
        %v1431 = vadd.f32 %v1232, %v746
        %v1432 = vadd.f32 %v1235, %v749
        %v1433 = vadd.f32 %v1237, %v751
        %v1434 = vadd.f32 %v1240, %v754
        %v1435 = vadd.f32 %v1242, %v756
        %v1436 = vadd.f32 %v1245, %v759
        %v1437 = vadd.f32 %v1247, %v761
        %v1438 = vadd.f32 %v1250, %v764
        %v1439 = vadd.f32 %v1252, %v766
        %v1440 = vadd.f32 %v1255, %v769
        %v1441 = vadd.f32 %v1257, %v771
        %v1442 = vadd.f32 %v1260, %v774
        %v1443 = vadd.f32 %v1262, %v776
        %v1444 = vadd.f32 %v1265, %v779
        %v1445 = vadd.f32 %v1267, %v781
        %v1446 = vadd.f32 %v1270, %v784
        %v1447 = vadd.f32 %v1272, %v786
        %v1448 = vadd.f32 %v1275, %v789
        %v1449 = vadd.f32 %v1277, %v791
        %v1450 = vadd.f32 %v1280, %v794
        %v1451 = vadd.f32 %v1282, %v796
        %v1452 = vadd.f32 %v1285, %v799
        %v1453 = vadd.f32 %v1287, %v801
        %v1454 = vadd.f32 %v1290, %v804
        %v1455 = vadd.f32 %v1292, %v806
        %s1456 = scalar_lea.vmem %s326, 48 [#allocation11]
        %1457 = vst [vmem:[%s1456] sm:$0xff] %v1424
        %1458 = vst [vmem:[%s1456 + $0x8] sm:$0xff] %v1425
        %1459 = vst [vmem:[%s1456 + $0x40] sm:$0xff] %v1426
        %1460 = vst [vmem:[%s1456 + $0x48] sm:$0xff] %v1427
        %1461 = vst [vmem:[%s1456 + $0x80] sm:$0xff] %v1428
        %1462 = vst [vmem:[%s1456 + $0x88] sm:$0xff] %v1429
        %1463 = vst [vmem:[%s1456 + $0xc0] sm:$0xff] %v1430
        %1464 = vst [vmem:[%s1456 + $0xc8] sm:$0xff] %v1431
        %1465 = vst [vmem:[%s1456 + $0x100] sm:$0xff] %v1432
        %1466 = vst [vmem:[%s1456 + $0x108] sm:$0xff] %v1433
        %1467 = vst [vmem:[%s1456 + $0x140] sm:$0xff] %v1434
        %1468 = vst [vmem:[%s1456 + $0x148] sm:$0xff] %v1435
        %1469 = vst [vmem:[%s1456 + $0x180] sm:$0xff] %v1436
        %1470 = vst [vmem:[%s1456 + $0x188] sm:$0xff] %v1437
        %1471 = vst [vmem:[%s1456 + $0x1c0] sm:$0xff] %v1438
        %1472 = vst [vmem:[%s1456 + $0x1c8] sm:$0xff] %v1439
        %1473 = vst [vmem:[%s1456 + $0x200] sm:$0xff] %v1440
        %1474 = vst [vmem:[%s1456 + $0x208] sm:$0xff] %v1441
        %1475 = vst [vmem:[%s1456 + $0x240] sm:$0xff] %v1442
        %1476 = vst [vmem:[%s1456 + $0x248] sm:$0xff] %v1443
        %1477 = vst [vmem:[%s1456 + $0x280] sm:$0xff] %v1444
        %1478 = vst [vmem:[%s1456 + $0x288] sm:$0xff] %v1445
        %1479 = vst [vmem:[%s1456 + $0x2c0] sm:$0xff] %v1446
        %1480 = vst [vmem:[%s1456 + $0x2c8] sm:$0xff] %v1447
        %1481 = vst [vmem:[%s1456 + $0x300] sm:$0xff] %v1448
        %1482 = vst [vmem:[%s1456 + $0x308] sm:$0xff] %v1449
        %1483 = vst [vmem:[%s1456 + $0x340] sm:$0xff] %v1450
        %1484 = vst [vmem:[%s1456 + $0x348] sm:$0xff] %v1451
        %1485 = vst [vmem:[%s1456 + $0x380] sm:$0xff] %v1452
        %1486 = vst [vmem:[%s1456 + $0x388] sm:$0xff] %v1453
        %1487 = vst [vmem:[%s1456 + $0x3c0] sm:$0xff] %v1454
        %1488 = vst [vmem:[%s1456 + $0x3c8] sm:$0xff] %v1455
        %s1489 = sand.u32 %s158, 1
        %s1490 = scalar_lea.sflag [#allocation4], %s1489
        %s1491 = sand.u32 %s158, 1
        %s1492 = smul.addr %s1491, 1024
        %s1493 = scalar_lea.vmem [#allocation11], %s1492
        // Predicated region
        $region61: #{tpu_custom_call.1} parent=39 // pred_check
          %p1494 = pneg %p168
        $region62: #{tpu_custom_call.1} parent=39 // pred_check_branch
          %1496 = sbr.rel (%p1494) target = $region64
        $region63: #{tpu_custom_call.1} parent=39 // pred_region
          %s1497 = smul.u32 16, %s29
          %1499 = vsyncadd %s1490, 0
          %s1500 = smul.addr %s1497, 8
          %s1501 = smul.addr %s28, 128
          %s1502 = sadd.s32 %s1500, %s1501
          %s1503 = smul.addr %s1502, 8
          %s1504 = scalar_lea.hbm %s5, %s1503
          %s1505 = sshll.u32 %s1493, 4
          %s1506 = int_to_ptr.vmem [resolvable:$true] %s1505
          %s1507 = sshll.u32 %s1504, 4
          %s1508 = int_to_ptr.hbm [resolvable:$true] %s1507
          %1513 = dma.vmem_to_hbm [thread:$0]  %s1506, 16384, %s1508, %s1490, 128, 128, 8
        $region64: #{tpu_custom_call.1} parent=39 // pred_fallthru
          _
      $region40: #{tpu_custom_call.1} parent=5 // pred_fallthru
        _
      %p1514 = scmp.le.s32.totalorder 2, %s19
      // Predicated region
      $region65: #{tpu_custom_call.1} parent=5 // pred_check
        %p1515 = pneg %p1514
      $region66: #{tpu_custom_call.1} parent=5 // pred_check_branch
        %1517 = sbr.rel (%p1515) target = $region68
      $region67: #{tpu_custom_call.1} parent=5 // pred_region
        %s1518 = ssub.s32 %s19, 2
        // Predicated region
        $region69: #{tpu_custom_call.1} parent=67 // pred_check
          %p1519 = pneg %p174
        $region70: #{tpu_custom_call.1} parent=67 // pred_check_branch
          %1521 = sbr.rel (%p1519) target = $region72
        $region71: #{tpu_custom_call.1} parent=67 // pred_region
          %s1522 = sand.u32 %s159, 1
          %s1523 = scalar_lea.sflag [#allocation4], %s1522
          %s1524 = sand.u32 %s159, 1
          %s1525 = smul.addr %s1524, 1024
          %s1526 = scalar_lea.vmem [#allocation11], %s1525
          %1528 = dma.done %s1523, 16384
        $region72: #{tpu_custom_call.1} parent=67 // pred_fallthru
          _
      $region68: #{tpu_custom_call.1} parent=5 // pred_fallthru
        _
    $region6: #{tpu_custom_call.1} parent=1 // loop_footer
      %s23 = sadd.s32 1, %s19
    $region7: #{tpu_custom_call.1} parent=1 // loop_footer_branch
      %18 = sbr.rel target = $region3
    $region8: #{tpu_custom_call.1} parent=1 // loop_exit
      _
    %1529 = vsyncpa [#allocation3], 1
    %s1530 = scalar_lea.sflag [#allocation3], 1
    %1531 = vsyncpa %s1530, 1
    %1532 = vsyncpa [#allocation6], 1
    %1533 = vsyncpa [#allocation9], 1
    %1534 = vsyncpa [#allocation4], 1
    %s1535 = scalar_lea.sflag [#allocation4], 1
    %1536 = vsyncpa %s1535, 1

</llo_original>
